<compile_context>
chip_gen: v7x
topology: tpu7x:2x2x1
jax: 0.10.0
libtpu: 0.0.40
codegen_flags: <defaults>
</compile_context>

<pallas_src>
import jax
import jax.numpy as jnp
from jax.experimental import pallas as pl
from jax.experimental.pallas import tpu as pltpu


def _round_up(x, m):
    return ((x + m - 1) // m) * m


def _vmem_budget():
    """Returns (scoped vmem_limit_bytes, byte budget used for tile sizing)."""
    try:
        cap = int(pltpu.get_tpu_info().vmem_capacity_bytes)
        # ~half of physical VMEM, capped at 64 MiB:
        #   v7x (64 MiB physical)  -> 32 MiB scoped
        #   v5e/v6e (128 MiB)      -> 64 MiB scoped
        limit = min(cap // 2, 64 * 1024 * 1024)
    except Exception:  # no hw query available -> conservative, safe everywhere
        limit = 32 * 1024 * 1024
    # Leave headroom for double-buffering bookkeeping / compiler scratch.
    return limit, limit // 2


def _pick_tile(n, granule, bytes_per_item, budget, min_tiles=2):
    """Largest batch tile (multiple of `granule`) whose working set fits `budget`,
    capped so the grid has >= `min_tiles` steps when the batch allows it
    (keeps both v7x TensorCores busy)."""
    n_min = _round_up(max(n, 1), granule)
    tile = max(granule, (budget // max(bytes_per_item, 1)) // granule * granule)
    tile = min(tile, n_min)
    if n_min >= min_tiles * granule:
        tile = min(tile, _round_up(-(-n_min // min_tiles), granule))
    return tile


def _make_kernel(L_out, C1, C2, K, time_axis):
    """Build the fused conv1+ReLU+conv2+avgpool kernel.

    time_axis = 0: batch-on-lanes layout, x tile is (L, tile_n), output (C2, tile_n).
    time_axis = 1: time-on-lanes layout,  x tile is (tile_n, L), output (tile_n, C2).
    """
    inv_lout = 1.0 / float(L_out)

    def kernel(x_ref, w1_ref, b1_ref, w2_ref, b2_ref, out_ref):
        # Stride-2 taps read straight from the pipelined VMEM input window:
        # tap k at output position t corresponds to input time index 2*t + k,
        # so conv1 is computed only at the valid stride-2 positions.
        def tap(k):
            sl = pl.ds(k, L_out, stride=2)
            return x_ref[sl, :] if time_axis == 0 else x_ref[:, sl]

        taps = [tap(k) for k in range(K)]      # hoisted: reused by all C1 channels
        acc = [jnp.zeros(taps[0].shape, jnp.float32) for _ in range(C2)]

        # conv1 (Cin=1, K=5) as 5 VPU multiply-adds per channel, bias + ReLU,
        # then the 1x1 conv2 accumulated directly into C2 running sums.
        for c in range(C1):
            h = taps[0] * w1_ref[c, 0]
            for k in range(1, K):
                h = h + taps[k] * w1_ref[c, k]
            h = jnp.maximum(h + b1_ref[c], 0.0)
            for o in range(C2):
                acc[o] = acc[o] + h * w2_ref[o, c]

        # AdaptiveAvgPool1d(output_size=1): mean over the L_out positions.
        # conv2 bias added after the mean (exact — pooling weights sum to 1).
        pooled = [
            jnp.sum(acc[o], axis=time_axis, keepdims=True) * inv_lout + b2_ref[o]
            for o in range(C2)
        ]
        out_ref[...] = jnp.concatenate(pooled, axis=time_axis).astype(out_ref.dtype)

    return kernel


def simple_1d_cnn_forward(x, w1, b1, w2, b2, *, small_l_threshold=256):
    """Forward pass of Simple1DCNN.

    x: (N, 1, L) float; w1: (20, 1, 5); b1: (20,); w2: (2, 20, 1); b2: (2,).
    Returns (N, 2) for N > 1 and (2,) for N == 1 (matching torch's .squeeze()).
    """
    N, Cin, L = x.shape
    K, stride = 5, 2
    assert Cin == 1 and L >= K
    C1, C2 = int(w1.shape[0]), int(w2.shape[0])
    L_out = (L - K) // stride + 1

    w1_mat = w1[:, 0, :].astype(jnp.float32)       # (C1, K)  -> SMEM scalars
    b1_v = b1.astype(jnp.float32)                  # (C1,)
    w2_mat = w2[:, :, 0].astype(jnp.float32)       # (C2, C1) -> SMEM scalars
    b2_v = b2.astype(jnp.float32)                  # (C2,)

    vmem_limit, budget = _vmem_budget()
    smem = pl.BlockSpec(memory_space=pltpu.MemorySpace.SMEM)

    # Live VMEM bytes per batch element: double-buffered input (2*L) + 5 taps +
    # transient h + 2 accumulators (8*L_out) + double-buffered output.
    bytes_per_item = 4 * (2 * L + 8 * L_out + 2 * (C2 + 2))

    if L <= small_l_threshold:
        # ---- small-L path: batch on the 128-lane axis (full lane occupancy). ----
        tile_n = _pick_tile(N, 128, bytes_per_item, budget)
        n_pad = _round_up(N, tile_n)
        # One host-side layout change (transpose + batch pad to a lane multiple).
        # TODO(synk): for huge-N/small-L this is an extra HBM copy of x; an in-kernel
        # XLU transpose of each (tile_n, L) block would avoid it.
        xt = x[:, 0, :].astype(jnp.float32).T                      # (L, N)
        if n_pad != N:
            xt = jnp.pad(xt, ((0, 0), (0, n_pad - N)))
        kernel = _make_kernel(L_out, C1, C2, K, time_axis=0)
        out = pl.pallas_call(
            kernel,
            out_shape=jax.ShapeDtypeStruct((C2, n_pad), jnp.float32),
            grid_spec=pltpu.PrefetchScalarGridSpec(
                num_scalar_prefetch=0,
                grid=(n_pad // tile_n,),
                in_specs=[
                    pl.BlockSpec((L, tile_n), lambda i: (0, i)),   # batch on lanes
                    smem, smem, smem, smem,                        # w1, b1, w2, b2
                ],
                out_specs=pl.BlockSpec((C2, tile_n), lambda i: (0, i)),  # lane-dense
            ),
            compiler_params=pltpu.CompilerParams(
                dimension_semantics=("parallel",),                 # batch tiles independent
                vmem_limit_bytes=vmem_limit,
            ),
        )(xt, w1_mat, b1_v, w2_mat, b2_v)
        out = out[:, :N].T                                         # (N, C2)
    else:
        # ---- large-L path: time on lanes, x kept in native (N, 1, L) layout. ----
        tile_n = _pick_tile(N, 8, bytes_per_item, budget)
        n_pad = _round_up(N, tile_n)
        xin = x if x.dtype == jnp.float32 else x.astype(jnp.float32)
        if n_pad != N:                                             # pad only if ragged
            xin = jnp.pad(xin, ((0, n_pad - N), (0, 0), (0, 0)))
        kernel = _make_kernel(L_out, C1, C2, K, time_axis=1)
        out = pl.pallas_call(
            kernel,
            out_shape=jax.ShapeDtypeStruct((n_pad, C2), jnp.float32),
            grid_spec=pltpu.PrefetchScalarGridSpec(
                num_scalar_prefetch=0,
                grid=(n_pad // tile_n,),
                in_specs=[
                    # channel dim squeezed by the BlockSpec: kernel sees (tile_n, L)
                    pl.BlockSpec((tile_n, None, L), lambda i: (i, 0, 0)),
                    smem, smem, smem, smem,                        # w1, b1, w2, b2
                ],
                out_specs=pl.BlockSpec((tile_n, C2), lambda i: (i, 0)),
            ),
            compiler_params=pltpu.CompilerParams(
                dimension_semantics=("parallel",),
                vmem_limit_bytes=vmem_limit,
            ),
        )(xin, w1_mat, b1_v, w2_mat, b2_v)
        out = out[:N]
    return out[0] if N == 1 else out                               # torch-style squeeze()


def reference_forward(x, w1, b1, w2, b2):
    """Pure-JAX reference with identical semantics (sanity check)."""
    N, _, L = x.shape
    K, stride = 5, 2
    L_out = (L - K) // stride + 1
    t_idx = stride * jnp.arange(L_out)[:, None] + jnp.arange(K)[None, :]
    patches = x[:, 0, t_idx]                                       # (N, L_out, K)
    h = jnp.einsum('ntk,ck->ntc', patches, w1[:, 0, :]) + b1       # conv1
    h = jnp.maximum(h, 0.0)                                        # ReLU
    y = jnp.einsum('ntc,oc->nto', h, w2[:, :, 0]) + b2             # 1x1 conv2
    out = jnp.mean(y, axis=1)                                      # avg pool
    return out[0] if N == 1 else out                               # squeeze


if __name__ == "__main__":
    key = jax.random.PRNGKey(0)
    k_x, k_w1, k_b1, k_w2 = jax.random.split(key, 4)

    # Deterministic parameter init (shapes from the module's __init__).
    w1 = jax.random.normal(k_w1, (20, 1, 5), dtype=jnp.float32) * 0.1
    b1 = jax.random.normal(k_b1, (20,), dtype=jnp.float32) * 0.1
    w2 = jax.random.normal(k_w2, (2, 20, 1), dtype=jnp.float32) * 0.1
    b2 = jnp.array([61.0, 2.8], dtype=jnp.float32)                 # as set in the module

    # Small-L path (batch-on-lanes): batch=16, channels=1, length=16.
    x = jax.random.normal(k_x, (16, 1, 16), dtype=jnp.float32)
    out = jax.block_until_ready(simple_1d_cnn_forward(x, w1, b1, w2, b2))
    assert out.shape == (16, 2)
    assert jnp.allclose(out, reference_forward(x, w1, b1, w2, b2), atol=1e-4, rtol=1e-4)

    # Ragged tiny batch (N=2) and torch-squeeze case (N=1).
    x2 = jax.random.normal(k_x, (2, 1, 16), dtype=jnp.float32)
    out2 = jax.block_until_ready(simple_1d_cnn_forward(x2, w1, b1, w2, b2))
    assert out2.shape == (2, 2)
    assert jnp.allclose(out2, reference_forward(x2, w1, b1, w2, b2), atol=1e-4, rtol=1e-4)

    x1 = jax.random.normal(k_x, (1, 1, 16), dtype=jnp.float32)
    out1 = jax.block_until_ready(simple_1d_cnn_forward(x1, w1, b1, w2, b2))
    assert out1.shape == (2,)
    assert jnp.allclose(out1, reference_forward(x1, w1, b1, w2, b2), atol=1e-4, rtol=1e-4)

    # Large-L path (time-on-lanes, 2 grid tiles on the batch axis): batch=16, length=384.
    x3 = jax.random.normal(k_x, (16, 1, 384), dtype=jnp.float32)
    out3 = jax.block_until_ready(simple_1d_cnn_forward(x3, w1, b1, w2, b2))
    assert out3.shape == (16, 2)
    assert jnp.allclose(out3, reference_forward(x3, w1, b1, w2, b2), atol=1e-4, rtol=1e-4)

    print("KERNEL_OK")
</pallas_src>

<mosaic_0001>
module attributes {stable_mosaic.version = 11 : i64} {
  func.func @kernel(%arg0: i32, %arg1: memref<16x128xf32, #tpu.memory_space<vmem>>, %arg2: memref<20x5xf32, #tpu.memory_space<smem>>, %arg3: memref<20xf32, #tpu.memory_space<smem>>, %arg4: memref<2x20xf32, #tpu.memory_space<smem>>, %arg5: memref<2xf32, #tpu.memory_space<smem>>, %arg6: memref<2x128xf32, #tpu.memory_space<vmem>>) attributes {dimension_semantics = [#tpu.dimension_semantics<parallel>], iteration_bounds = array<i64: 1>, scalar_prefetch = 0 : i64, scratch_operands = 0 : i64, tpu.core_type = #tpu.core_type<tc>, window_params = [{transform_indices = @transform_0, window_bounds = array<i64: 16, 128>}, {transform_indices = @transform_1, window_bounds = array<i64: 20, 5>}, {transform_indices = @transform_2, window_bounds = array<i64: 20>}, {transform_indices = @transform_3, window_bounds = array<i64: 2, 20>}, {transform_indices = @transform_4, window_bounds = array<i64: 2>}, {transform_indices = @transform_5, window_bounds = array<i64: 2, 128>}]} {
    %c0 = arith.constant 0 : index
    %c0_0 = arith.constant 0 : index
    %0 = tpu.strided_load %arg1[%c0, %c0_0] {strides = array<i32: 2, 1>} : memref<16x128xf32, #tpu.memory_space<vmem>>, vector<6x128xf32>
    %c1 = arith.constant 1 : index
    %c0_1 = arith.constant 0 : index
    %1 = tpu.strided_load %arg1[%c1, %c0_1] {strides = array<i32: 2, 1>} : memref<16x128xf32, #tpu.memory_space<vmem>>, vector<6x128xf32>
    %c2 = arith.constant 2 : index
    %c0_2 = arith.constant 0 : index
    %2 = tpu.strided_load %arg1[%c2, %c0_2] {strides = array<i32: 2, 1>} : memref<16x128xf32, #tpu.memory_space<vmem>>, vector<6x128xf32>
    %c3 = arith.constant 3 : index
    %c0_3 = arith.constant 0 : index
    %3 = tpu.strided_load %arg1[%c3, %c0_3] {strides = array<i32: 2, 1>} : memref<16x128xf32, #tpu.memory_space<vmem>>, vector<6x128xf32>
    %c4 = arith.constant 4 : index
    %c0_4 = arith.constant 0 : index
    %4 = tpu.strided_load %arg1[%c4, %c0_4] {strides = array<i32: 2, 1>} : memref<16x128xf32, #tpu.memory_space<vmem>>, vector<6x128xf32>
    %cst = arith.constant 0.000000e+00 : f32
    %5 = vector.broadcast %cst : f32 to vector<6x128xf32>
    %cst_5 = arith.constant 0.000000e+00 : f32
    %6 = vector.broadcast %cst_5 : f32 to vector<6x128xf32>
    %c0_6 = arith.constant 0 : index
    %c0_7 = arith.constant 0 : index
    %7 = memref.load %arg2[%c0_6, %c0_7] : memref<20x5xf32, #tpu.memory_space<smem>>
    %8 = vector.broadcast %7 : f32 to vector<6x128xf32>
    %9 = arith.mulf %0, %8 : vector<6x128xf32>
    %c0_8 = arith.constant 0 : index
    %c1_9 = arith.constant 1 : index
    %10 = memref.load %arg2[%c0_8, %c1_9] : memref<20x5xf32, #tpu.memory_space<smem>>
    %11 = vector.broadcast %10 : f32 to vector<6x128xf32>
    %12 = arith.mulf %1, %11 : vector<6x128xf32>
    %13 = arith.addf %9, %12 : vector<6x128xf32>
    %c0_10 = arith.constant 0 : index
    %c2_11 = arith.constant 2 : index
    %14 = memref.load %arg2[%c0_10, %c2_11] : memref<20x5xf32, #tpu.memory_space<smem>>
    %15 = vector.broadcast %14 : f32 to vector<6x128xf32>
    %16 = arith.mulf %2, %15 : vector<6x128xf32>
    %17 = arith.addf %13, %16 : vector<6x128xf32>
    %c0_12 = arith.constant 0 : index
    %c3_13 = arith.constant 3 : index
    %18 = memref.load %arg2[%c0_12, %c3_13] : memref<20x5xf32, #tpu.memory_space<smem>>
    %19 = vector.broadcast %18 : f32 to vector<6x128xf32>
    %20 = arith.mulf %3, %19 : vector<6x128xf32>
    %21 = arith.addf %17, %20 : vector<6x128xf32>
    %c0_14 = arith.constant 0 : index
    %c4_15 = arith.constant 4 : index
    %22 = memref.load %arg2[%c0_14, %c4_15] : memref<20x5xf32, #tpu.memory_space<smem>>
    %23 = vector.broadcast %22 : f32 to vector<6x128xf32>
    %24 = arith.mulf %4, %23 : vector<6x128xf32>
    %25 = arith.addf %21, %24 : vector<6x128xf32>
    %c0_16 = arith.constant 0 : index
    %26 = memref.load %arg3[%c0_16] : memref<20xf32, #tpu.memory_space<smem>>
    %27 = vector.broadcast %26 : f32 to vector<6x128xf32>
    %28 = arith.addf %25, %27 : vector<6x128xf32>
    %cst_17 = arith.constant 0.000000e+00 : f32
    %29 = vector.broadcast %cst_17 : f32 to vector<6x128xf32>
    %30 = arith.maximumf %28, %29 : vector<6x128xf32>
    %c0_18 = arith.constant 0 : index
    %c0_19 = arith.constant 0 : index
    %31 = memref.load %arg4[%c0_18, %c0_19] : memref<2x20xf32, #tpu.memory_space<smem>>
    %32 = vector.broadcast %31 : f32 to vector<6x128xf32>
    %33 = arith.mulf %30, %32 : vector<6x128xf32>
    %34 = arith.addf %5, %33 : vector<6x128xf32>
    %c1_20 = arith.constant 1 : index
    %c0_21 = arith.constant 0 : index
    %35 = memref.load %arg4[%c1_20, %c0_21] : memref<2x20xf32, #tpu.memory_space<smem>>
    %36 = vector.broadcast %35 : f32 to vector<6x128xf32>
    %37 = arith.mulf %30, %36 : vector<6x128xf32>
    %38 = arith.addf %6, %37 : vector<6x128xf32>
    %c1_22 = arith.constant 1 : index
    %c0_23 = arith.constant 0 : index
    %39 = memref.load %arg2[%c1_22, %c0_23] : memref<20x5xf32, #tpu.memory_space<smem>>
    %40 = vector.broadcast %39 : f32 to vector<6x128xf32>
    %41 = arith.mulf %0, %40 : vector<6x128xf32>
    %c1_24 = arith.constant 1 : index
    %c1_25 = arith.constant 1 : index
    %42 = memref.load %arg2[%c1_24, %c1_25] : memref<20x5xf32, #tpu.memory_space<smem>>
    %43 = vector.broadcast %42 : f32 to vector<6x128xf32>
    %44 = arith.mulf %1, %43 : vector<6x128xf32>
    %45 = arith.addf %41, %44 : vector<6x128xf32>
    %c1_26 = arith.constant 1 : index
    %c2_27 = arith.constant 2 : index
    %46 = memref.load %arg2[%c1_26, %c2_27] : memref<20x5xf32, #tpu.memory_space<smem>>
    %47 = vector.broadcast %46 : f32 to vector<6x128xf32>
    %48 = arith.mulf %2, %47 : vector<6x128xf32>
    %49 = arith.addf %45, %48 : vector<6x128xf32>
    %c1_28 = arith.constant 1 : index
    %c3_29 = arith.constant 3 : index
    %50 = memref.load %arg2[%c1_28, %c3_29] : memref<20x5xf32, #tpu.memory_space<smem>>
    %51 = vector.broadcast %50 : f32 to vector<6x128xf32>
    %52 = arith.mulf %3, %51 : vector<6x128xf32>
    %53 = arith.addf %49, %52 : vector<6x128xf32>
    %c1_30 = arith.constant 1 : index
    %c4_31 = arith.constant 4 : index
    %54 = memref.load %arg2[%c1_30, %c4_31] : memref<20x5xf32, #tpu.memory_space<smem>>
    %55 = vector.broadcast %54 : f32 to vector<6x128xf32>
    %56 = arith.mulf %4, %55 : vector<6x128xf32>
    %57 = arith.addf %53, %56 : vector<6x128xf32>
    %c1_32 = arith.constant 1 : index
    %58 = memref.load %arg3[%c1_32] : memref<20xf32, #tpu.memory_space<smem>>
    %59 = vector.broadcast %58 : f32 to vector<6x128xf32>
    %60 = arith.addf %57, %59 : vector<6x128xf32>
    %cst_33 = arith.constant 0.000000e+00 : f32
    %61 = vector.broadcast %cst_33 : f32 to vector<6x128xf32>
    %62 = arith.maximumf %60, %61 : vector<6x128xf32>
    %c0_34 = arith.constant 0 : index
    %c1_35 = arith.constant 1 : index
    %63 = memref.load %arg4[%c0_34, %c1_35] : memref<2x20xf32, #tpu.memory_space<smem>>
    %64 = vector.broadcast %63 : f32 to vector<6x128xf32>
    %65 = arith.mulf %62, %64 : vector<6x128xf32>
    %66 = arith.addf %34, %65 : vector<6x128xf32>
    %c1_36 = arith.constant 1 : index
    %c1_37 = arith.constant 1 : index
    %67 = memref.load %arg4[%c1_36, %c1_37] : memref<2x20xf32, #tpu.memory_space<smem>>
    %68 = vector.broadcast %67 : f32 to vector<6x128xf32>
    %69 = arith.mulf %62, %68 : vector<6x128xf32>
    %70 = arith.addf %38, %69 : vector<6x128xf32>
    %c2_38 = arith.constant 2 : index
    %c0_39 = arith.constant 0 : index
    %71 = memref.load %arg2[%c2_38, %c0_39] : memref<20x5xf32, #tpu.memory_space<smem>>
    %72 = vector.broadcast %71 : f32 to vector<6x128xf32>
    %73 = arith.mulf %0, %72 : vector<6x128xf32>
    %c2_40 = arith.constant 2 : index
    %c1_41 = arith.constant 1 : index
    %74 = memref.load %arg2[%c2_40, %c1_41] : memref<20x5xf32, #tpu.memory_space<smem>>
    %75 = vector.broadcast %74 : f32 to vector<6x128xf32>
    %76 = arith.mulf %1, %75 : vector<6x128xf32>
    %77 = arith.addf %73, %76 : vector<6x128xf32>
    %c2_42 = arith.constant 2 : index
    %c2_43 = arith.constant 2 : index
    %78 = memref.load %arg2[%c2_42, %c2_43] : memref<20x5xf32, #tpu.memory_space<smem>>
    %79 = vector.broadcast %78 : f32 to vector<6x128xf32>
    %80 = arith.mulf %2, %79 : vector<6x128xf32>
    %81 = arith.addf %77, %80 : vector<6x128xf32>
    %c2_44 = arith.constant 2 : index
    %c3_45 = arith.constant 3 : index
    %82 = memref.load %arg2[%c2_44, %c3_45] : memref<20x5xf32, #tpu.memory_space<smem>>
    %83 = vector.broadcast %82 : f32 to vector<6x128xf32>
    %84 = arith.mulf %3, %83 : vector<6x128xf32>
    %85 = arith.addf %81, %84 : vector<6x128xf32>
    %c2_46 = arith.constant 2 : index
    %c4_47 = arith.constant 4 : index
    %86 = memref.load %arg2[%c2_46, %c4_47] : memref<20x5xf32, #tpu.memory_space<smem>>
    %87 = vector.broadcast %86 : f32 to vector<6x128xf32>
    %88 = arith.mulf %4, %87 : vector<6x128xf32>
    %89 = arith.addf %85, %88 : vector<6x128xf32>
    %c2_48 = arith.constant 2 : index
    %90 = memref.load %arg3[%c2_48] : memref<20xf32, #tpu.memory_space<smem>>
    %91 = vector.broadcast %90 : f32 to vector<6x128xf32>
    %92 = arith.addf %89, %91 : vector<6x128xf32>
    %cst_49 = arith.constant 0.000000e+00 : f32
    %93 = vector.broadcast %cst_49 : f32 to vector<6x128xf32>
    %94 = arith.maximumf %92, %93 : vector<6x128xf32>
    %c0_50 = arith.constant 0 : index
    %c2_51 = arith.constant 2 : index
    %95 = memref.load %arg4[%c0_50, %c2_51] : memref<2x20xf32, #tpu.memory_space<smem>>
    %96 = vector.broadcast %95 : f32 to vector<6x128xf32>
    %97 = arith.mulf %94, %96 : vector<6x128xf32>
    %98 = arith.addf %66, %97 : vector<6x128xf32>
    %c1_52 = arith.constant 1 : index
    %c2_53 = arith.constant 2 : index
    %99 = memref.load %arg4[%c1_52, %c2_53] : memref<2x20xf32, #tpu.memory_space<smem>>
    %100 = vector.broadcast %99 : f32 to vector<6x128xf32>
    %101 = arith.mulf %94, %100 : vector<6x128xf32>
    %102 = arith.addf %70, %101 : vector<6x128xf32>
    %c3_54 = arith.constant 3 : index
    %c0_55 = arith.constant 0 : index
    %103 = memref.load %arg2[%c3_54, %c0_55] : memref<20x5xf32, #tpu.memory_space<smem>>
    %104 = vector.broadcast %103 : f32 to vector<6x128xf32>
    %105 = arith.mulf %0, %104 : vector<6x128xf32>
    %c3_56 = arith.constant 3 : index
    %c1_57 = arith.constant 1 : index
    %106 = memref.load %arg2[%c3_56, %c1_57] : memref<20x5xf32, #tpu.memory_space<smem>>
    %107 = vector.broadcast %106 : f32 to vector<6x128xf32>
    %108 = arith.mulf %1, %107 : vector<6x128xf32>
    %109 = arith.addf %105, %108 : vector<6x128xf32>
    %c3_58 = arith.constant 3 : index
    %c2_59 = arith.constant 2 : index
    %110 = memref.load %arg2[%c3_58, %c2_59] : memref<20x5xf32, #tpu.memory_space<smem>>
    %111 = vector.broadcast %110 : f32 to vector<6x128xf32>
    %112 = arith.mulf %2, %111 : vector<6x128xf32>
    %113 = arith.addf %109, %112 : vector<6x128xf32>
    %c3_60 = arith.constant 3 : index
    %c3_61 = arith.constant 3 : index
    %114 = memref.load %arg2[%c3_60, %c3_61] : memref<20x5xf32, #tpu.memory_space<smem>>
    %115 = vector.broadcast %114 : f32 to vector<6x128xf32>
    %116 = arith.mulf %3, %115 : vector<6x128xf32>
    %117 = arith.addf %113, %116 : vector<6x128xf32>
    %c3_62 = arith.constant 3 : index
    %c4_63 = arith.constant 4 : index
    %118 = memref.load %arg2[%c3_62, %c4_63] : memref<20x5xf32, #tpu.memory_space<smem>>
    %119 = vector.broadcast %118 : f32 to vector<6x128xf32>
    %120 = arith.mulf %4, %119 : vector<6x128xf32>
    %121 = arith.addf %117, %120 : vector<6x128xf32>
    %c3_64 = arith.constant 3 : index
    %122 = memref.load %arg3[%c3_64] : memref<20xf32, #tpu.memory_space<smem>>
    %123 = vector.broadcast %122 : f32 to vector<6x128xf32>
    %124 = arith.addf %121, %123 : vector<6x128xf32>
    %cst_65 = arith.constant 0.000000e+00 : f32
    %125 = vector.broadcast %cst_65 : f32 to vector<6x128xf32>
    %126 = arith.maximumf %124, %125 : vector<6x128xf32>
    %c0_66 = arith.constant 0 : index
    %c3_67 = arith.constant 3 : index
    %127 = memref.load %arg4[%c0_66, %c3_67] : memref<2x20xf32, #tpu.memory_space<smem>>
    %128 = vector.broadcast %127 : f32 to vector<6x128xf32>
    %129 = arith.mulf %126, %128 : vector<6x128xf32>
    %130 = arith.addf %98, %129 : vector<6x128xf32>
    %c1_68 = arith.constant 1 : index
    %c3_69 = arith.constant 3 : index
    %131 = memref.load %arg4[%c1_68, %c3_69] : memref<2x20xf32, #tpu.memory_space<smem>>
    %132 = vector.broadcast %131 : f32 to vector<6x128xf32>
    %133 = arith.mulf %126, %132 : vector<6x128xf32>
    %134 = arith.addf %102, %133 : vector<6x128xf32>
    %c4_70 = arith.constant 4 : index
    %c0_71 = arith.constant 0 : index
    %135 = memref.load %arg2[%c4_70, %c0_71] : memref<20x5xf32, #tpu.memory_space<smem>>
    %136 = vector.broadcast %135 : f32 to vector<6x128xf32>
    %137 = arith.mulf %0, %136 : vector<6x128xf32>
    %c4_72 = arith.constant 4 : index
    %c1_73 = arith.constant 1 : index
    %138 = memref.load %arg2[%c4_72, %c1_73] : memref<20x5xf32, #tpu.memory_space<smem>>
    %139 = vector.broadcast %138 : f32 to vector<6x128xf32>
    %140 = arith.mulf %1, %139 : vector<6x128xf32>
    %141 = arith.addf %137, %140 : vector<6x128xf32>
    %c4_74 = arith.constant 4 : index
    %c2_75 = arith.constant 2 : index
    %142 = memref.load %arg2[%c4_74, %c2_75] : memref<20x5xf32, #tpu.memory_space<smem>>
    %143 = vector.broadcast %142 : f32 to vector<6x128xf32>
    %144 = arith.mulf %2, %143 : vector<6x128xf32>
    %145 = arith.addf %141, %144 : vector<6x128xf32>
    %c4_76 = arith.constant 4 : index
    %c3_77 = arith.constant 3 : index
    %146 = memref.load %arg2[%c4_76, %c3_77] : memref<20x5xf32, #tpu.memory_space<smem>>
    %147 = vector.broadcast %146 : f32 to vector<6x128xf32>
    %148 = arith.mulf %3, %147 : vector<6x128xf32>
    %149 = arith.addf %145, %148 : vector<6x128xf32>
    %c4_78 = arith.constant 4 : index
    %c4_79 = arith.constant 4 : index
    %150 = memref.load %arg2[%c4_78, %c4_79] : memref<20x5xf32, #tpu.memory_space<smem>>
    %151 = vector.broadcast %150 : f32 to vector<6x128xf32>
    %152 = arith.mulf %4, %151 : vector<6x128xf32>
    %153 = arith.addf %149, %152 : vector<6x128xf32>
    %c4_80 = arith.constant 4 : index
    %154 = memref.load %arg3[%c4_80] : memref<20xf32, #tpu.memory_space<smem>>
    %155 = vector.broadcast %154 : f32 to vector<6x128xf32>
    %156 = arith.addf %153, %155 : vector<6x128xf32>
    %cst_81 = arith.constant 0.000000e+00 : f32
    %157 = vector.broadcast %cst_81 : f32 to vector<6x128xf32>
    %158 = arith.maximumf %156, %157 : vector<6x128xf32>
    %c0_82 = arith.constant 0 : index
    %c4_83 = arith.constant 4 : index
    %159 = memref.load %arg4[%c0_82, %c4_83] : memref<2x20xf32, #tpu.memory_space<smem>>
    %160 = vector.broadcast %159 : f32 to vector<6x128xf32>
    %161 = arith.mulf %158, %160 : vector<6x128xf32>
    %162 = arith.addf %130, %161 : vector<6x128xf32>
    %c1_84 = arith.constant 1 : index
    %c4_85 = arith.constant 4 : index
    %163 = memref.load %arg4[%c1_84, %c4_85] : memref<2x20xf32, #tpu.memory_space<smem>>
    %164 = vector.broadcast %163 : f32 to vector<6x128xf32>
    %165 = arith.mulf %158, %164 : vector<6x128xf32>
    %166 = arith.addf %134, %165 : vector<6x128xf32>
    %c5 = arith.constant 5 : index
    %c0_86 = arith.constant 0 : index
    %167 = memref.load %arg2[%c5, %c0_86] : memref<20x5xf32, #tpu.memory_space<smem>>
    %168 = vector.broadcast %167 : f32 to vector<6x128xf32>
    %169 = arith.mulf %0, %168 : vector<6x128xf32>
    %c5_87 = arith.constant 5 : index
    %c1_88 = arith.constant 1 : index
    %170 = memref.load %arg2[%c5_87, %c1_88] : memref<20x5xf32, #tpu.memory_space<smem>>
    %171 = vector.broadcast %170 : f32 to vector<6x128xf32>
    %172 = arith.mulf %1, %171 : vector<6x128xf32>
    %173 = arith.addf %169, %172 : vector<6x128xf32>
    %c5_89 = arith.constant 5 : index
    %c2_90 = arith.constant 2 : index
    %174 = memref.load %arg2[%c5_89, %c2_90] : memref<20x5xf32, #tpu.memory_space<smem>>
    %175 = vector.broadcast %174 : f32 to vector<6x128xf32>
    %176 = arith.mulf %2, %175 : vector<6x128xf32>
    %177 = arith.addf %173, %176 : vector<6x128xf32>
    %c5_91 = arith.constant 5 : index
    %c3_92 = arith.constant 3 : index
    %178 = memref.load %arg2[%c5_91, %c3_92] : memref<20x5xf32, #tpu.memory_space<smem>>
    %179 = vector.broadcast %178 : f32 to vector<6x128xf32>
    %180 = arith.mulf %3, %179 : vector<6x128xf32>
    %181 = arith.addf %177, %180 : vector<6x128xf32>
    %c5_93 = arith.constant 5 : index
    %c4_94 = arith.constant 4 : index
    %182 = memref.load %arg2[%c5_93, %c4_94] : memref<20x5xf32, #tpu.memory_space<smem>>
    %183 = vector.broadcast %182 : f32 to vector<6x128xf32>
    %184 = arith.mulf %4, %183 : vector<6x128xf32>
    %185 = arith.addf %181, %184 : vector<6x128xf32>
    %c5_95 = arith.constant 5 : index
    %186 = memref.load %arg3[%c5_95] : memref<20xf32, #tpu.memory_space<smem>>
    %187 = vector.broadcast %186 : f32 to vector<6x128xf32>
    %188 = arith.addf %185, %187 : vector<6x128xf32>
    %cst_96 = arith.constant 0.000000e+00 : f32
    %189 = vector.broadcast %cst_96 : f32 to vector<6x128xf32>
    %190 = arith.maximumf %188, %189 : vector<6x128xf32>
    %c0_97 = arith.constant 0 : index
    %c5_98 = arith.constant 5 : index
    %191 = memref.load %arg4[%c0_97, %c5_98] : memref<2x20xf32, #tpu.memory_space<smem>>
    %192 = vector.broadcast %191 : f32 to vector<6x128xf32>
    %193 = arith.mulf %190, %192 : vector<6x128xf32>
    %194 = arith.addf %162, %193 : vector<6x128xf32>
    %c1_99 = arith.constant 1 : index
    %c5_100 = arith.constant 5 : index
    %195 = memref.load %arg4[%c1_99, %c5_100] : memref<2x20xf32, #tpu.memory_space<smem>>
    %196 = vector.broadcast %195 : f32 to vector<6x128xf32>
    %197 = arith.mulf %190, %196 : vector<6x128xf32>
    %198 = arith.addf %166, %197 : vector<6x128xf32>
    %c6 = arith.constant 6 : index
    %c0_101 = arith.constant 0 : index
    %199 = memref.load %arg2[%c6, %c0_101] : memref<20x5xf32, #tpu.memory_space<smem>>
    %200 = vector.broadcast %199 : f32 to vector<6x128xf32>
    %201 = arith.mulf %0, %200 : vector<6x128xf32>
    %c6_102 = arith.constant 6 : index
    %c1_103 = arith.constant 1 : index
    %202 = memref.load %arg2[%c6_102, %c1_103] : memref<20x5xf32, #tpu.memory_space<smem>>
    %203 = vector.broadcast %202 : f32 to vector<6x128xf32>
    %204 = arith.mulf %1, %203 : vector<6x128xf32>
    %205 = arith.addf %201, %204 : vector<6x128xf32>
    %c6_104 = arith.constant 6 : index
    %c2_105 = arith.constant 2 : index
    %206 = memref.load %arg2[%c6_104, %c2_105] : memref<20x5xf32, #tpu.memory_space<smem>>
    %207 = vector.broadcast %206 : f32 to vector<6x128xf32>
    %208 = arith.mulf %2, %207 : vector<6x128xf32>
    %209 = arith.addf %205, %208 : vector<6x128xf32>
    %c6_106 = arith.constant 6 : index
    %c3_107 = arith.constant 3 : index
    %210 = memref.load %arg2[%c6_106, %c3_107] : memref<20x5xf32, #tpu.memory_space<smem>>
    %211 = vector.broadcast %210 : f32 to vector<6x128xf32>
    %212 = arith.mulf %3, %211 : vector<6x128xf32>
    %213 = arith.addf %209, %212 : vector<6x128xf32>
    %c6_108 = arith.constant 6 : index
    %c4_109 = arith.constant 4 : index
    %214 = memref.load %arg2[%c6_108, %c4_109] : memref<20x5xf32, #tpu.memory_space<smem>>
    %215 = vector.broadcast %214 : f32 to vector<6x128xf32>
    %216 = arith.mulf %4, %215 : vector<6x128xf32>
    %217 = arith.addf %213, %216 : vector<6x128xf32>
    %c6_110 = arith.constant 6 : index
    %218 = memref.load %arg3[%c6_110] : memref<20xf32, #tpu.memory_space<smem>>
    %219 = vector.broadcast %218 : f32 to vector<6x128xf32>
    %220 = arith.addf %217, %219 : vector<6x128xf32>
    %cst_111 = arith.constant 0.000000e+00 : f32
    %221 = vector.broadcast %cst_111 : f32 to vector<6x128xf32>
    %222 = arith.maximumf %220, %221 : vector<6x128xf32>
    %c0_112 = arith.constant 0 : index
    %c6_113 = arith.constant 6 : index
    %223 = memref.load %arg4[%c0_112, %c6_113] : memref<2x20xf32, #tpu.memory_space<smem>>
    %224 = vector.broadcast %223 : f32 to vector<6x128xf32>
    %225 = arith.mulf %222, %224 : vector<6x128xf32>
    %226 = arith.addf %194, %225 : vector<6x128xf32>
    %c1_114 = arith.constant 1 : index
    %c6_115 = arith.constant 6 : index
    %227 = memref.load %arg4[%c1_114, %c6_115] : memref<2x20xf32, #tpu.memory_space<smem>>
    %228 = vector.broadcast %227 : f32 to vector<6x128xf32>
    %229 = arith.mulf %222, %228 : vector<6x128xf32>
    %230 = arith.addf %198, %229 : vector<6x128xf32>
    %c7 = arith.constant 7 : index
    %c0_116 = arith.constant 0 : index
    %231 = memref.load %arg2[%c7, %c0_116] : memref<20x5xf32, #tpu.memory_space<smem>>
    %232 = vector.broadcast %231 : f32 to vector<6x128xf32>
    %233 = arith.mulf %0, %232 : vector<6x128xf32>
    %c7_117 = arith.constant 7 : index
    %c1_118 = arith.constant 1 : index
    %234 = memref.load %arg2[%c7_117, %c1_118] : memref<20x5xf32, #tpu.memory_space<smem>>
    %235 = vector.broadcast %234 : f32 to vector<6x128xf32>
    %236 = arith.mulf %1, %235 : vector<6x128xf32>
    %237 = arith.addf %233, %236 : vector<6x128xf32>
    %c7_119 = arith.constant 7 : index
    %c2_120 = arith.constant 2 : index
    %238 = memref.load %arg2[%c7_119, %c2_120] : memref<20x5xf32, #tpu.memory_space<smem>>
    %239 = vector.broadcast %238 : f32 to vector<6x128xf32>
    %240 = arith.mulf %2, %239 : vector<6x128xf32>
    %241 = arith.addf %237, %240 : vector<6x128xf32>
    %c7_121 = arith.constant 7 : index
    %c3_122 = arith.constant 3 : index
    %242 = memref.load %arg2[%c7_121, %c3_122] : memref<20x5xf32, #tpu.memory_space<smem>>
    %243 = vector.broadcast %242 : f32 to vector<6x128xf32>
    %244 = arith.mulf %3, %243 : vector<6x128xf32>
    %245 = arith.addf %241, %244 : vector<6x128xf32>
    %c7_123 = arith.constant 7 : index
    %c4_124 = arith.constant 4 : index
    %246 = memref.load %arg2[%c7_123, %c4_124] : memref<20x5xf32, #tpu.memory_space<smem>>
    %247 = vector.broadcast %246 : f32 to vector<6x128xf32>
    %248 = arith.mulf %4, %247 : vector<6x128xf32>
    %249 = arith.addf %245, %248 : vector<6x128xf32>
    %c7_125 = arith.constant 7 : index
    %250 = memref.load %arg3[%c7_125] : memref<20xf32, #tpu.memory_space<smem>>
    %251 = vector.broadcast %250 : f32 to vector<6x128xf32>
    %252 = arith.addf %249, %251 : vector<6x128xf32>
    %cst_126 = arith.constant 0.000000e+00 : f32
    %253 = vector.broadcast %cst_126 : f32 to vector<6x128xf32>
    %254 = arith.maximumf %252, %253 : vector<6x128xf32>
    %c0_127 = arith.constant 0 : index
    %c7_128 = arith.constant 7 : index
    %255 = memref.load %arg4[%c0_127, %c7_128] : memref<2x20xf32, #tpu.memory_space<smem>>
    %256 = vector.broadcast %255 : f32 to vector<6x128xf32>
    %257 = arith.mulf %254, %256 : vector<6x128xf32>
    %258 = arith.addf %226, %257 : vector<6x128xf32>
    %c1_129 = arith.constant 1 : index
    %c7_130 = arith.constant 7 : index
    %259 = memref.load %arg4[%c1_129, %c7_130] : memref<2x20xf32, #tpu.memory_space<smem>>
    %260 = vector.broadcast %259 : f32 to vector<6x128xf32>
    %261 = arith.mulf %254, %260 : vector<6x128xf32>
    %262 = arith.addf %230, %261 : vector<6x128xf32>
    %c8 = arith.constant 8 : index
    %c0_131 = arith.constant 0 : index
    %263 = memref.load %arg2[%c8, %c0_131] : memref<20x5xf32, #tpu.memory_space<smem>>
    %264 = vector.broadcast %263 : f32 to vector<6x128xf32>
    %265 = arith.mulf %0, %264 : vector<6x128xf32>
    %c8_132 = arith.constant 8 : index
    %c1_133 = arith.constant 1 : index
    %266 = memref.load %arg2[%c8_132, %c1_133] : memref<20x5xf32, #tpu.memory_space<smem>>
    %267 = vector.broadcast %266 : f32 to vector<6x128xf32>
    %268 = arith.mulf %1, %267 : vector<6x128xf32>
    %269 = arith.addf %265, %268 : vector<6x128xf32>
    %c8_134 = arith.constant 8 : index
    %c2_135 = arith.constant 2 : index
    %270 = memref.load %arg2[%c8_134, %c2_135] : memref<20x5xf32, #tpu.memory_space<smem>>
    %271 = vector.broadcast %270 : f32 to vector<6x128xf32>
    %272 = arith.mulf %2, %271 : vector<6x128xf32>
    %273 = arith.addf %269, %272 : vector<6x128xf32>
    %c8_136 = arith.constant 8 : index
    %c3_137 = arith.constant 3 : index
    %274 = memref.load %arg2[%c8_136, %c3_137] : memref<20x5xf32, #tpu.memory_space<smem>>
    %275 = vector.broadcast %274 : f32 to vector<6x128xf32>
    %276 = arith.mulf %3, %275 : vector<6x128xf32>
    %277 = arith.addf %273, %276 : vector<6x128xf32>
    %c8_138 = arith.constant 8 : index
    %c4_139 = arith.constant 4 : index
    %278 = memref.load %arg2[%c8_138, %c4_139] : memref<20x5xf32, #tpu.memory_space<smem>>
    %279 = vector.broadcast %278 : f32 to vector<6x128xf32>
    %280 = arith.mulf %4, %279 : vector<6x128xf32>
    %281 = arith.addf %277, %280 : vector<6x128xf32>
    %c8_140 = arith.constant 8 : index
    %282 = memref.load %arg3[%c8_140] : memref<20xf32, #tpu.memory_space<smem>>
    %283 = vector.broadcast %282 : f32 to vector<6x128xf32>
    %284 = arith.addf %281, %283 : vector<6x128xf32>
    %cst_141 = arith.constant 0.000000e+00 : f32
    %285 = vector.broadcast %cst_141 : f32 to vector<6x128xf32>
    %286 = arith.maximumf %284, %285 : vector<6x128xf32>
    %c0_142 = arith.constant 0 : index
    %c8_143 = arith.constant 8 : index
    %287 = memref.load %arg4[%c0_142, %c8_143] : memref<2x20xf32, #tpu.memory_space<smem>>
    %288 = vector.broadcast %287 : f32 to vector<6x128xf32>
    %289 = arith.mulf %286, %288 : vector<6x128xf32>
    %290 = arith.addf %258, %289 : vector<6x128xf32>
    %c1_144 = arith.constant 1 : index
    %c8_145 = arith.constant 8 : index
    %291 = memref.load %arg4[%c1_144, %c8_145] : memref<2x20xf32, #tpu.memory_space<smem>>
    %292 = vector.broadcast %291 : f32 to vector<6x128xf32>
    %293 = arith.mulf %286, %292 : vector<6x128xf32>
    %294 = arith.addf %262, %293 : vector<6x128xf32>
    %c9 = arith.constant 9 : index
    %c0_146 = arith.constant 0 : index
    %295 = memref.load %arg2[%c9, %c0_146] : memref<20x5xf32, #tpu.memory_space<smem>>
    %296 = vector.broadcast %295 : f32 to vector<6x128xf32>
    %297 = arith.mulf %0, %296 : vector<6x128xf32>
    %c9_147 = arith.constant 9 : index
    %c1_148 = arith.constant 1 : index
    %298 = memref.load %arg2[%c9_147, %c1_148] : memref<20x5xf32, #tpu.memory_space<smem>>
    %299 = vector.broadcast %298 : f32 to vector<6x128xf32>
    %300 = arith.mulf %1, %299 : vector<6x128xf32>
    %301 = arith.addf %297, %300 : vector<6x128xf32>
    %c9_149 = arith.constant 9 : index
    %c2_150 = arith.constant 2 : index
    %302 = memref.load %arg2[%c9_149, %c2_150] : memref<20x5xf32, #tpu.memory_space<smem>>
    %303 = vector.broadcast %302 : f32 to vector<6x128xf32>
    %304 = arith.mulf %2, %303 : vector<6x128xf32>
    %305 = arith.addf %301, %304 : vector<6x128xf32>
    %c9_151 = arith.constant 9 : index
    %c3_152 = arith.constant 3 : index
    %306 = memref.load %arg2[%c9_151, %c3_152] : memref<20x5xf32, #tpu.memory_space<smem>>
    %307 = vector.broadcast %306 : f32 to vector<6x128xf32>
    %308 = arith.mulf %3, %307 : vector<6x128xf32>
    %309 = arith.addf %305, %308 : vector<6x128xf32>
    %c9_153 = arith.constant 9 : index
    %c4_154 = arith.constant 4 : index
    %310 = memref.load %arg2[%c9_153, %c4_154] : memref<20x5xf32, #tpu.memory_space<smem>>
    %311 = vector.broadcast %310 : f32 to vector<6x128xf32>
    %312 = arith.mulf %4, %311 : vector<6x128xf32>
    %313 = arith.addf %309, %312 : vector<6x128xf32>
    %c9_155 = arith.constant 9 : index
    %314 = memref.load %arg3[%c9_155] : memref<20xf32, #tpu.memory_space<smem>>
    %315 = vector.broadcast %314 : f32 to vector<6x128xf32>
    %316 = arith.addf %313, %315 : vector<6x128xf32>
    %cst_156 = arith.constant 0.000000e+00 : f32
    %317 = vector.broadcast %cst_156 : f32 to vector<6x128xf32>
    %318 = arith.maximumf %316, %317 : vector<6x128xf32>
    %c0_157 = arith.constant 0 : index
    %c9_158 = arith.constant 9 : index
    %319 = memref.load %arg4[%c0_157, %c9_158] : memref<2x20xf32, #tpu.memory_space<smem>>
    %320 = vector.broadcast %319 : f32 to vector<6x128xf32>
    %321 = arith.mulf %318, %320 : vector<6x128xf32>
    %322 = arith.addf %290, %321 : vector<6x128xf32>
    %c1_159 = arith.constant 1 : index
    %c9_160 = arith.constant 9 : index
    %323 = memref.load %arg4[%c1_159, %c9_160] : memref<2x20xf32, #tpu.memory_space<smem>>
    %324 = vector.broadcast %323 : f32 to vector<6x128xf32>
    %325 = arith.mulf %318, %324 : vector<6x128xf32>
    %326 = arith.addf %294, %325 : vector<6x128xf32>
    %c10 = arith.constant 10 : index
    %c0_161 = arith.constant 0 : index
    %327 = memref.load %arg2[%c10, %c0_161] : memref<20x5xf32, #tpu.memory_space<smem>>
    %328 = vector.broadcast %327 : f32 to vector<6x128xf32>
    %329 = arith.mulf %0, %328 : vector<6x128xf32>
    %c10_162 = arith.constant 10 : index
    %c1_163 = arith.constant 1 : index
    %330 = memref.load %arg2[%c10_162, %c1_163] : memref<20x5xf32, #tpu.memory_space<smem>>
    %331 = vector.broadcast %330 : f32 to vector<6x128xf32>
    %332 = arith.mulf %1, %331 : vector<6x128xf32>
    %333 = arith.addf %329, %332 : vector<6x128xf32>
    %c10_164 = arith.constant 10 : index
    %c2_165 = arith.constant 2 : index
    %334 = memref.load %arg2[%c10_164, %c2_165] : memref<20x5xf32, #tpu.memory_space<smem>>
    %335 = vector.broadcast %334 : f32 to vector<6x128xf32>
    %336 = arith.mulf %2, %335 : vector<6x128xf32>
    %337 = arith.addf %333, %336 : vector<6x128xf32>
    %c10_166 = arith.constant 10 : index
    %c3_167 = arith.constant 3 : index
    %338 = memref.load %arg2[%c10_166, %c3_167] : memref<20x5xf32, #tpu.memory_space<smem>>
    %339 = vector.broadcast %338 : f32 to vector<6x128xf32>
    %340 = arith.mulf %3, %339 : vector<6x128xf32>
    %341 = arith.addf %337, %340 : vector<6x128xf32>
    %c10_168 = arith.constant 10 : index
    %c4_169 = arith.constant 4 : index
    %342 = memref.load %arg2[%c10_168, %c4_169] : memref<20x5xf32, #tpu.memory_space<smem>>
    %343 = vector.broadcast %342 : f32 to vector<6x128xf32>
    %344 = arith.mulf %4, %343 : vector<6x128xf32>
    %345 = arith.addf %341, %344 : vector<6x128xf32>
    %c10_170 = arith.constant 10 : index
    %346 = memref.load %arg3[%c10_170] : memref<20xf32, #tpu.memory_space<smem>>
    %347 = vector.broadcast %346 : f32 to vector<6x128xf32>
    %348 = arith.addf %345, %347 : vector<6x128xf32>
    %cst_171 = arith.constant 0.000000e+00 : f32
    %349 = vector.broadcast %cst_171 : f32 to vector<6x128xf32>
    %350 = arith.maximumf %348, %349 : vector<6x128xf32>
    %c0_172 = arith.constant 0 : index
    %c10_173 = arith.constant 10 : index
    %351 = memref.load %arg4[%c0_172, %c10_173] : memref<2x20xf32, #tpu.memory_space<smem>>
    %352 = vector.broadcast %351 : f32 to vector<6x128xf32>
    %353 = arith.mulf %350, %352 : vector<6x128xf32>
    %354 = arith.addf %322, %353 : vector<6x128xf32>
    %c1_174 = arith.constant 1 : index
    %c10_175 = arith.constant 10 : index
    %355 = memref.load %arg4[%c1_174, %c10_175] : memref<2x20xf32, #tpu.memory_space<smem>>
    %356 = vector.broadcast %355 : f32 to vector<6x128xf32>
    %357 = arith.mulf %350, %356 : vector<6x128xf32>
    %358 = arith.addf %326, %357 : vector<6x128xf32>
    %c11 = arith.constant 11 : index
    %c0_176 = arith.constant 0 : index
    %359 = memref.load %arg2[%c11, %c0_176] : memref<20x5xf32, #tpu.memory_space<smem>>
    %360 = vector.broadcast %359 : f32 to vector<6x128xf32>
    %361 = arith.mulf %0, %360 : vector<6x128xf32>
    %c11_177 = arith.constant 11 : index
    %c1_178 = arith.constant 1 : index
    %362 = memref.load %arg2[%c11_177, %c1_178] : memref<20x5xf32, #tpu.memory_space<smem>>
    %363 = vector.broadcast %362 : f32 to vector<6x128xf32>
    %364 = arith.mulf %1, %363 : vector<6x128xf32>
    %365 = arith.addf %361, %364 : vector<6x128xf32>
    %c11_179 = arith.constant 11 : index
    %c2_180 = arith.constant 2 : index
    %366 = memref.load %arg2[%c11_179, %c2_180] : memref<20x5xf32, #tpu.memory_space<smem>>
    %367 = vector.broadcast %366 : f32 to vector<6x128xf32>
    %368 = arith.mulf %2, %367 : vector<6x128xf32>
    %369 = arith.addf %365, %368 : vector<6x128xf32>
    %c11_181 = arith.constant 11 : index
    %c3_182 = arith.constant 3 : index
    %370 = memref.load %arg2[%c11_181, %c3_182] : memref<20x5xf32, #tpu.memory_space<smem>>
    %371 = vector.broadcast %370 : f32 to vector<6x128xf32>
    %372 = arith.mulf %3, %371 : vector<6x128xf32>
    %373 = arith.addf %369, %372 : vector<6x128xf32>
    %c11_183 = arith.constant 11 : index
    %c4_184 = arith.constant 4 : index
    %374 = memref.load %arg2[%c11_183, %c4_184] : memref<20x5xf32, #tpu.memory_space<smem>>
    %375 = vector.broadcast %374 : f32 to vector<6x128xf32>
    %376 = arith.mulf %4, %375 : vector<6x128xf32>
    %377 = arith.addf %373, %376 : vector<6x128xf32>
    %c11_185 = arith.constant 11 : index
    %378 = memref.load %arg3[%c11_185] : memref<20xf32, #tpu.memory_space<smem>>
    %379 = vector.broadcast %378 : f32 to vector<6x128xf32>
    %380 = arith.addf %377, %379 : vector<6x128xf32>
    %cst_186 = arith.constant 0.000000e+00 : f32
    %381 = vector.broadcast %cst_186 : f32 to vector<6x128xf32>
    %382 = arith.maximumf %380, %381 : vector<6x128xf32>
    %c0_187 = arith.constant 0 : index
    %c11_188 = arith.constant 11 : index
    %383 = memref.load %arg4[%c0_187, %c11_188] : memref<2x20xf32, #tpu.memory_space<smem>>
    %384 = vector.broadcast %383 : f32 to vector<6x128xf32>
    %385 = arith.mulf %382, %384 : vector<6x128xf32>
    %386 = arith.addf %354, %385 : vector<6x128xf32>
    %c1_189 = arith.constant 1 : index
    %c11_190 = arith.constant 11 : index
    %387 = memref.load %arg4[%c1_189, %c11_190] : memref<2x20xf32, #tpu.memory_space<smem>>
    %388 = vector.broadcast %387 : f32 to vector<6x128xf32>
    %389 = arith.mulf %382, %388 : vector<6x128xf32>
    %390 = arith.addf %358, %389 : vector<6x128xf32>
    %c12 = arith.constant 12 : index
    %c0_191 = arith.constant 0 : index
    %391 = memref.load %arg2[%c12, %c0_191] : memref<20x5xf32, #tpu.memory_space<smem>>
    %392 = vector.broadcast %391 : f32 to vector<6x128xf32>
    %393 = arith.mulf %0, %392 : vector<6x128xf32>
    %c12_192 = arith.constant 12 : index
    %c1_193 = arith.constant 1 : index
    %394 = memref.load %arg2[%c12_192, %c1_193] : memref<20x5xf32, #tpu.memory_space<smem>>
    %395 = vector.broadcast %394 : f32 to vector<6x128xf32>
    %396 = arith.mulf %1, %395 : vector<6x128xf32>
    %397 = arith.addf %393, %396 : vector<6x128xf32>
    %c12_194 = arith.constant 12 : index
    %c2_195 = arith.constant 2 : index
    %398 = memref.load %arg2[%c12_194, %c2_195] : memref<20x5xf32, #tpu.memory_space<smem>>
    %399 = vector.broadcast %398 : f32 to vector<6x128xf32>
    %400 = arith.mulf %2, %399 : vector<6x128xf32>
    %401 = arith.addf %397, %400 : vector<6x128xf32>
    %c12_196 = arith.constant 12 : index
    %c3_197 = arith.constant 3 : index
    %402 = memref.load %arg2[%c12_196, %c3_197] : memref<20x5xf32, #tpu.memory_space<smem>>
    %403 = vector.broadcast %402 : f32 to vector<6x128xf32>
    %404 = arith.mulf %3, %403 : vector<6x128xf32>
    %405 = arith.addf %401, %404 : vector<6x128xf32>
    %c12_198 = arith.constant 12 : index
    %c4_199 = arith.constant 4 : index
    %406 = memref.load %arg2[%c12_198, %c4_199] : memref<20x5xf32, #tpu.memory_space<smem>>
    %407 = vector.broadcast %406 : f32 to vector<6x128xf32>
    %408 = arith.mulf %4, %407 : vector<6x128xf32>
    %409 = arith.addf %405, %408 : vector<6x128xf32>
    %c12_200 = arith.constant 12 : index
    %410 = memref.load %arg3[%c12_200] : memref<20xf32, #tpu.memory_space<smem>>
    %411 = vector.broadcast %410 : f32 to vector<6x128xf32>
    %412 = arith.addf %409, %411 : vector<6x128xf32>
    %cst_201 = arith.constant 0.000000e+00 : f32
    %413 = vector.broadcast %cst_201 : f32 to vector<6x128xf32>
    %414 = arith.maximumf %412, %413 : vector<6x128xf32>
    %c0_202 = arith.constant 0 : index
    %c12_203 = arith.constant 12 : index
    %415 = memref.load %arg4[%c0_202, %c12_203] : memref<2x20xf32, #tpu.memory_space<smem>>
    %416 = vector.broadcast %415 : f32 to vector<6x128xf32>
    %417 = arith.mulf %414, %416 : vector<6x128xf32>
    %418 = arith.addf %386, %417 : vector<6x128xf32>
    %c1_204 = arith.constant 1 : index
    %c12_205 = arith.constant 12 : index
    %419 = memref.load %arg4[%c1_204, %c12_205] : memref<2x20xf32, #tpu.memory_space<smem>>
    %420 = vector.broadcast %419 : f32 to vector<6x128xf32>
    %421 = arith.mulf %414, %420 : vector<6x128xf32>
    %422 = arith.addf %390, %421 : vector<6x128xf32>
    %c13 = arith.constant 13 : index
    %c0_206 = arith.constant 0 : index
    %423 = memref.load %arg2[%c13, %c0_206] : memref<20x5xf32, #tpu.memory_space<smem>>
    %424 = vector.broadcast %423 : f32 to vector<6x128xf32>
    %425 = arith.mulf %0, %424 : vector<6x128xf32>
    %c13_207 = arith.constant 13 : index
    %c1_208 = arith.constant 1 : index
    %426 = memref.load %arg2[%c13_207, %c1_208] : memref<20x5xf32, #tpu.memory_space<smem>>
    %427 = vector.broadcast %426 : f32 to vector<6x128xf32>
    %428 = arith.mulf %1, %427 : vector<6x128xf32>
    %429 = arith.addf %425, %428 : vector<6x128xf32>
    %c13_209 = arith.constant 13 : index
    %c2_210 = arith.constant 2 : index
    %430 = memref.load %arg2[%c13_209, %c2_210] : memref<20x5xf32, #tpu.memory_space<smem>>
    %431 = vector.broadcast %430 : f32 to vector<6x128xf32>
    %432 = arith.mulf %2, %431 : vector<6x128xf32>
    %433 = arith.addf %429, %432 : vector<6x128xf32>
    %c13_211 = arith.constant 13 : index
    %c3_212 = arith.constant 3 : index
    %434 = memref.load %arg2[%c13_211, %c3_212] : memref<20x5xf32, #tpu.memory_space<smem>>
    %435 = vector.broadcast %434 : f32 to vector<6x128xf32>
    %436 = arith.mulf %3, %435 : vector<6x128xf32>
    %437 = arith.addf %433, %436 : vector<6x128xf32>
    %c13_213 = arith.constant 13 : index
    %c4_214 = arith.constant 4 : index
    %438 = memref.load %arg2[%c13_213, %c4_214] : memref<20x5xf32, #tpu.memory_space<smem>>
    %439 = vector.broadcast %438 : f32 to vector<6x128xf32>
    %440 = arith.mulf %4, %439 : vector<6x128xf32>
    %441 = arith.addf %437, %440 : vector<6x128xf32>
    %c13_215 = arith.constant 13 : index
    %442 = memref.load %arg3[%c13_215] : memref<20xf32, #tpu.memory_space<smem>>
    %443 = vector.broadcast %442 : f32 to vector<6x128xf32>
    %444 = arith.addf %441, %443 : vector<6x128xf32>
    %cst_216 = arith.constant 0.000000e+00 : f32
    %445 = vector.broadcast %cst_216 : f32 to vector<6x128xf32>
    %446 = arith.maximumf %444, %445 : vector<6x128xf32>
    %c0_217 = arith.constant 0 : index
    %c13_218 = arith.constant 13 : index
    %447 = memref.load %arg4[%c0_217, %c13_218] : memref<2x20xf32, #tpu.memory_space<smem>>
    %448 = vector.broadcast %447 : f32 to vector<6x128xf32>
    %449 = arith.mulf %446, %448 : vector<6x128xf32>
    %450 = arith.addf %418, %449 : vector<6x128xf32>
    %c1_219 = arith.constant 1 : index
    %c13_220 = arith.constant 13 : index
    %451 = memref.load %arg4[%c1_219, %c13_220] : memref<2x20xf32, #tpu.memory_space<smem>>
    %452 = vector.broadcast %451 : f32 to vector<6x128xf32>
    %453 = arith.mulf %446, %452 : vector<6x128xf32>
    %454 = arith.addf %422, %453 : vector<6x128xf32>
    %c14 = arith.constant 14 : index
    %c0_221 = arith.constant 0 : index
    %455 = memref.load %arg2[%c14, %c0_221] : memref<20x5xf32, #tpu.memory_space<smem>>
    %456 = vector.broadcast %455 : f32 to vector<6x128xf32>
    %457 = arith.mulf %0, %456 : vector<6x128xf32>
    %c14_222 = arith.constant 14 : index
    %c1_223 = arith.constant 1 : index
    %458 = memref.load %arg2[%c14_222, %c1_223] : memref<20x5xf32, #tpu.memory_space<smem>>
    %459 = vector.broadcast %458 : f32 to vector<6x128xf32>
    %460 = arith.mulf %1, %459 : vector<6x128xf32>
    %461 = arith.addf %457, %460 : vector<6x128xf32>
    %c14_224 = arith.constant 14 : index
    %c2_225 = arith.constant 2 : index
    %462 = memref.load %arg2[%c14_224, %c2_225] : memref<20x5xf32, #tpu.memory_space<smem>>
    %463 = vector.broadcast %462 : f32 to vector<6x128xf32>
    %464 = arith.mulf %2, %463 : vector<6x128xf32>
    %465 = arith.addf %461, %464 : vector<6x128xf32>
    %c14_226 = arith.constant 14 : index
    %c3_227 = arith.constant 3 : index
    %466 = memref.load %arg2[%c14_226, %c3_227] : memref<20x5xf32, #tpu.memory_space<smem>>
    %467 = vector.broadcast %466 : f32 to vector<6x128xf32>
    %468 = arith.mulf %3, %467 : vector<6x128xf32>
    %469 = arith.addf %465, %468 : vector<6x128xf32>
    %c14_228 = arith.constant 14 : index
    %c4_229 = arith.constant 4 : index
    %470 = memref.load %arg2[%c14_228, %c4_229] : memref<20x5xf32, #tpu.memory_space<smem>>
    %471 = vector.broadcast %470 : f32 to vector<6x128xf32>
    %472 = arith.mulf %4, %471 : vector<6x128xf32>
    %473 = arith.addf %469, %472 : vector<6x128xf32>
    %c14_230 = arith.constant 14 : index
    %474 = memref.load %arg3[%c14_230] : memref<20xf32, #tpu.memory_space<smem>>
    %475 = vector.broadcast %474 : f32 to vector<6x128xf32>
    %476 = arith.addf %473, %475 : vector<6x128xf32>
    %cst_231 = arith.constant 0.000000e+00 : f32
    %477 = vector.broadcast %cst_231 : f32 to vector<6x128xf32>
    %478 = arith.maximumf %476, %477 : vector<6x128xf32>
    %c0_232 = arith.constant 0 : index
    %c14_233 = arith.constant 14 : index
    %479 = memref.load %arg4[%c0_232, %c14_233] : memref<2x20xf32, #tpu.memory_space<smem>>
    %480 = vector.broadcast %479 : f32 to vector<6x128xf32>
    %481 = arith.mulf %478, %480 : vector<6x128xf32>
    %482 = arith.addf %450, %481 : vector<6x128xf32>
    %c1_234 = arith.constant 1 : index
    %c14_235 = arith.constant 14 : index
    %483 = memref.load %arg4[%c1_234, %c14_235] : memref<2x20xf32, #tpu.memory_space<smem>>
    %484 = vector.broadcast %483 : f32 to vector<6x128xf32>
    %485 = arith.mulf %478, %484 : vector<6x128xf32>
    %486 = arith.addf %454, %485 : vector<6x128xf32>
    %c15 = arith.constant 15 : index
    %c0_236 = arith.constant 0 : index
    %487 = memref.load %arg2[%c15, %c0_236] : memref<20x5xf32, #tpu.memory_space<smem>>
    %488 = vector.broadcast %487 : f32 to vector<6x128xf32>
    %489 = arith.mulf %0, %488 : vector<6x128xf32>
    %c15_237 = arith.constant 15 : index
    %c1_238 = arith.constant 1 : index
    %490 = memref.load %arg2[%c15_237, %c1_238] : memref<20x5xf32, #tpu.memory_space<smem>>
    %491 = vector.broadcast %490 : f32 to vector<6x128xf32>
    %492 = arith.mulf %1, %491 : vector<6x128xf32>
    %493 = arith.addf %489, %492 : vector<6x128xf32>
    %c15_239 = arith.constant 15 : index
    %c2_240 = arith.constant 2 : index
    %494 = memref.load %arg2[%c15_239, %c2_240] : memref<20x5xf32, #tpu.memory_space<smem>>
    %495 = vector.broadcast %494 : f32 to vector<6x128xf32>
    %496 = arith.mulf %2, %495 : vector<6x128xf32>
    %497 = arith.addf %493, %496 : vector<6x128xf32>
    %c15_241 = arith.constant 15 : index
    %c3_242 = arith.constant 3 : index
    %498 = memref.load %arg2[%c15_241, %c3_242] : memref<20x5xf32, #tpu.memory_space<smem>>
    %499 = vector.broadcast %498 : f32 to vector<6x128xf32>
    %500 = arith.mulf %3, %499 : vector<6x128xf32>
    %501 = arith.addf %497, %500 : vector<6x128xf32>
    %c15_243 = arith.constant 15 : index
    %c4_244 = arith.constant 4 : index
    %502 = memref.load %arg2[%c15_243, %c4_244] : memref<20x5xf32, #tpu.memory_space<smem>>
    %503 = vector.broadcast %502 : f32 to vector<6x128xf32>
    %504 = arith.mulf %4, %503 : vector<6x128xf32>
    %505 = arith.addf %501, %504 : vector<6x128xf32>
    %c15_245 = arith.constant 15 : index
    %506 = memref.load %arg3[%c15_245] : memref<20xf32, #tpu.memory_space<smem>>
    %507 = vector.broadcast %506 : f32 to vector<6x128xf32>
    %508 = arith.addf %505, %507 : vector<6x128xf32>
    %cst_246 = arith.constant 0.000000e+00 : f32
    %509 = vector.broadcast %cst_246 : f32 to vector<6x128xf32>
    %510 = arith.maximumf %508, %509 : vector<6x128xf32>
    %c0_247 = arith.constant 0 : index
    %c15_248 = arith.constant 15 : index
    %511 = memref.load %arg4[%c0_247, %c15_248] : memref<2x20xf32, #tpu.memory_space<smem>>
    %512 = vector.broadcast %511 : f32 to vector<6x128xf32>
    %513 = arith.mulf %510, %512 : vector<6x128xf32>
    %514 = arith.addf %482, %513 : vector<6x128xf32>
    %c1_249 = arith.constant 1 : index
    %c15_250 = arith.constant 15 : index
    %515 = memref.load %arg4[%c1_249, %c15_250] : memref<2x20xf32, #tpu.memory_space<smem>>
    %516 = vector.broadcast %515 : f32 to vector<6x128xf32>
    %517 = arith.mulf %510, %516 : vector<6x128xf32>
    %518 = arith.addf %486, %517 : vector<6x128xf32>
    %c16 = arith.constant 16 : index
    %c0_251 = arith.constant 0 : index
    %519 = memref.load %arg2[%c16, %c0_251] : memref<20x5xf32, #tpu.memory_space<smem>>
    %520 = vector.broadcast %519 : f32 to vector<6x128xf32>
    %521 = arith.mulf %0, %520 : vector<6x128xf32>
    %c16_252 = arith.constant 16 : index
    %c1_253 = arith.constant 1 : index
    %522 = memref.load %arg2[%c16_252, %c1_253] : memref<20x5xf32, #tpu.memory_space<smem>>
    %523 = vector.broadcast %522 : f32 to vector<6x128xf32>
    %524 = arith.mulf %1, %523 : vector<6x128xf32>
    %525 = arith.addf %521, %524 : vector<6x128xf32>
    %c16_254 = arith.constant 16 : index
    %c2_255 = arith.constant 2 : index
    %526 = memref.load %arg2[%c16_254, %c2_255] : memref<20x5xf32, #tpu.memory_space<smem>>
    %527 = vector.broadcast %526 : f32 to vector<6x128xf32>
    %528 = arith.mulf %2, %527 : vector<6x128xf32>
    %529 = arith.addf %525, %528 : vector<6x128xf32>
    %c16_256 = arith.constant 16 : index
    %c3_257 = arith.constant 3 : index
    %530 = memref.load %arg2[%c16_256, %c3_257] : memref<20x5xf32, #tpu.memory_space<smem>>
    %531 = vector.broadcast %530 : f32 to vector<6x128xf32>
    %532 = arith.mulf %3, %531 : vector<6x128xf32>
    %533 = arith.addf %529, %532 : vector<6x128xf32>
    %c16_258 = arith.constant 16 : index
    %c4_259 = arith.constant 4 : index
    %534 = memref.load %arg2[%c16_258, %c4_259] : memref<20x5xf32, #tpu.memory_space<smem>>
    %535 = vector.broadcast %534 : f32 to vector<6x128xf32>
    %536 = arith.mulf %4, %535 : vector<6x128xf32>
    %537 = arith.addf %533, %536 : vector<6x128xf32>
    %c16_260 = arith.constant 16 : index
    %538 = memref.load %arg3[%c16_260] : memref<20xf32, #tpu.memory_space<smem>>
    %539 = vector.broadcast %538 : f32 to vector<6x128xf32>
    %540 = arith.addf %537, %539 : vector<6x128xf32>
    %cst_261 = arith.constant 0.000000e+00 : f32
    %541 = vector.broadcast %cst_261 : f32 to vector<6x128xf32>
    %542 = arith.maximumf %540, %541 : vector<6x128xf32>
    %c0_262 = arith.constant 0 : index
    %c16_263 = arith.constant 16 : index
    %543 = memref.load %arg4[%c0_262, %c16_263] : memref<2x20xf32, #tpu.memory_space<smem>>
    %544 = vector.broadcast %543 : f32 to vector<6x128xf32>
    %545 = arith.mulf %542, %544 : vector<6x128xf32>
    %546 = arith.addf %514, %545 : vector<6x128xf32>
    %c1_264 = arith.constant 1 : index
    %c16_265 = arith.constant 16 : index
    %547 = memref.load %arg4[%c1_264, %c16_265] : memref<2x20xf32, #tpu.memory_space<smem>>
    %548 = vector.broadcast %547 : f32 to vector<6x128xf32>
    %549 = arith.mulf %542, %548 : vector<6x128xf32>
    %550 = arith.addf %518, %549 : vector<6x128xf32>
    %c17 = arith.constant 17 : index
    %c0_266 = arith.constant 0 : index
    %551 = memref.load %arg2[%c17, %c0_266] : memref<20x5xf32, #tpu.memory_space<smem>>
    %552 = vector.broadcast %551 : f32 to vector<6x128xf32>
    %553 = arith.mulf %0, %552 : vector<6x128xf32>
    %c17_267 = arith.constant 17 : index
    %c1_268 = arith.constant 1 : index
    %554 = memref.load %arg2[%c17_267, %c1_268] : memref<20x5xf32, #tpu.memory_space<smem>>
    %555 = vector.broadcast %554 : f32 to vector<6x128xf32>
    %556 = arith.mulf %1, %555 : vector<6x128xf32>
    %557 = arith.addf %553, %556 : vector<6x128xf32>
    %c17_269 = arith.constant 17 : index
    %c2_270 = arith.constant 2 : index
    %558 = memref.load %arg2[%c17_269, %c2_270] : memref<20x5xf32, #tpu.memory_space<smem>>
    %559 = vector.broadcast %558 : f32 to vector<6x128xf32>
    %560 = arith.mulf %2, %559 : vector<6x128xf32>
    %561 = arith.addf %557, %560 : vector<6x128xf32>
    %c17_271 = arith.constant 17 : index
    %c3_272 = arith.constant 3 : index
    %562 = memref.load %arg2[%c17_271, %c3_272] : memref<20x5xf32, #tpu.memory_space<smem>>
    %563 = vector.broadcast %562 : f32 to vector<6x128xf32>
    %564 = arith.mulf %3, %563 : vector<6x128xf32>
    %565 = arith.addf %561, %564 : vector<6x128xf32>
    %c17_273 = arith.constant 17 : index
    %c4_274 = arith.constant 4 : index
    %566 = memref.load %arg2[%c17_273, %c4_274] : memref<20x5xf32, #tpu.memory_space<smem>>
    %567 = vector.broadcast %566 : f32 to vector<6x128xf32>
    %568 = arith.mulf %4, %567 : vector<6x128xf32>
    %569 = arith.addf %565, %568 : vector<6x128xf32>
    %c17_275 = arith.constant 17 : index
    %570 = memref.load %arg3[%c17_275] : memref<20xf32, #tpu.memory_space<smem>>
    %571 = vector.broadcast %570 : f32 to vector<6x128xf32>
    %572 = arith.addf %569, %571 : vector<6x128xf32>
    %cst_276 = arith.constant 0.000000e+00 : f32
    %573 = vector.broadcast %cst_276 : f32 to vector<6x128xf32>
    %574 = arith.maximumf %572, %573 : vector<6x128xf32>
    %c0_277 = arith.constant 0 : index
    %c17_278 = arith.constant 17 : index
    %575 = memref.load %arg4[%c0_277, %c17_278] : memref<2x20xf32, #tpu.memory_space<smem>>
    %576 = vector.broadcast %575 : f32 to vector<6x128xf32>
    %577 = arith.mulf %574, %576 : vector<6x128xf32>
    %578 = arith.addf %546, %577 : vector<6x128xf32>
    %c1_279 = arith.constant 1 : index
    %c17_280 = arith.constant 17 : index
    %579 = memref.load %arg4[%c1_279, %c17_280] : memref<2x20xf32, #tpu.memory_space<smem>>
    %580 = vector.broadcast %579 : f32 to vector<6x128xf32>
    %581 = arith.mulf %574, %580 : vector<6x128xf32>
    %582 = arith.addf %550, %581 : vector<6x128xf32>
    %c18 = arith.constant 18 : index
    %c0_281 = arith.constant 0 : index
    %583 = memref.load %arg2[%c18, %c0_281] : memref<20x5xf32, #tpu.memory_space<smem>>
    %584 = vector.broadcast %583 : f32 to vector<6x128xf32>
    %585 = arith.mulf %0, %584 : vector<6x128xf32>
    %c18_282 = arith.constant 18 : index
    %c1_283 = arith.constant 1 : index
    %586 = memref.load %arg2[%c18_282, %c1_283] : memref<20x5xf32, #tpu.memory_space<smem>>
    %587 = vector.broadcast %586 : f32 to vector<6x128xf32>
    %588 = arith.mulf %1, %587 : vector<6x128xf32>
    %589 = arith.addf %585, %588 : vector<6x128xf32>
    %c18_284 = arith.constant 18 : index
    %c2_285 = arith.constant 2 : index
    %590 = memref.load %arg2[%c18_284, %c2_285] : memref<20x5xf32, #tpu.memory_space<smem>>
    %591 = vector.broadcast %590 : f32 to vector<6x128xf32>
    %592 = arith.mulf %2, %591 : vector<6x128xf32>
    %593 = arith.addf %589, %592 : vector<6x128xf32>
    %c18_286 = arith.constant 18 : index
    %c3_287 = arith.constant 3 : index
    %594 = memref.load %arg2[%c18_286, %c3_287] : memref<20x5xf32, #tpu.memory_space<smem>>
    %595 = vector.broadcast %594 : f32 to vector<6x128xf32>
    %596 = arith.mulf %3, %595 : vector<6x128xf32>
    %597 = arith.addf %593, %596 : vector<6x128xf32>
    %c18_288 = arith.constant 18 : index
    %c4_289 = arith.constant 4 : index
    %598 = memref.load %arg2[%c18_288, %c4_289] : memref<20x5xf32, #tpu.memory_space<smem>>
    %599 = vector.broadcast %598 : f32 to vector<6x128xf32>
    %600 = arith.mulf %4, %599 : vector<6x128xf32>
    %601 = arith.addf %597, %600 : vector<6x128xf32>
    %c18_290 = arith.constant 18 : index
    %602 = memref.load %arg3[%c18_290] : memref<20xf32, #tpu.memory_space<smem>>
    %603 = vector.broadcast %602 : f32 to vector<6x128xf32>
    %604 = arith.addf %601, %603 : vector<6x128xf32>
    %cst_291 = arith.constant 0.000000e+00 : f32
    %605 = vector.broadcast %cst_291 : f32 to vector<6x128xf32>
    %606 = arith.maximumf %604, %605 : vector<6x128xf32>
    %c0_292 = arith.constant 0 : index
    %c18_293 = arith.constant 18 : index
    %607 = memref.load %arg4[%c0_292, %c18_293] : memref<2x20xf32, #tpu.memory_space<smem>>
    %608 = vector.broadcast %607 : f32 to vector<6x128xf32>
    %609 = arith.mulf %606, %608 : vector<6x128xf32>
    %610 = arith.addf %578, %609 : vector<6x128xf32>
    %c1_294 = arith.constant 1 : index
    %c18_295 = arith.constant 18 : index
    %611 = memref.load %arg4[%c1_294, %c18_295] : memref<2x20xf32, #tpu.memory_space<smem>>
    %612 = vector.broadcast %611 : f32 to vector<6x128xf32>
    %613 = arith.mulf %606, %612 : vector<6x128xf32>
    %614 = arith.addf %582, %613 : vector<6x128xf32>
    %c19 = arith.constant 19 : index
    %c0_296 = arith.constant 0 : index
    %615 = memref.load %arg2[%c19, %c0_296] : memref<20x5xf32, #tpu.memory_space<smem>>
    %616 = vector.broadcast %615 : f32 to vector<6x128xf32>
    %617 = arith.mulf %0, %616 : vector<6x128xf32>
    %c19_297 = arith.constant 19 : index
    %c1_298 = arith.constant 1 : index
    %618 = memref.load %arg2[%c19_297, %c1_298] : memref<20x5xf32, #tpu.memory_space<smem>>
    %619 = vector.broadcast %618 : f32 to vector<6x128xf32>
    %620 = arith.mulf %1, %619 : vector<6x128xf32>
    %621 = arith.addf %617, %620 : vector<6x128xf32>
    %c19_299 = arith.constant 19 : index
    %c2_300 = arith.constant 2 : index
    %622 = memref.load %arg2[%c19_299, %c2_300] : memref<20x5xf32, #tpu.memory_space<smem>>
    %623 = vector.broadcast %622 : f32 to vector<6x128xf32>
    %624 = arith.mulf %2, %623 : vector<6x128xf32>
    %625 = arith.addf %621, %624 : vector<6x128xf32>
    %c19_301 = arith.constant 19 : index
    %c3_302 = arith.constant 3 : index
    %626 = memref.load %arg2[%c19_301, %c3_302] : memref<20x5xf32, #tpu.memory_space<smem>>
    %627 = vector.broadcast %626 : f32 to vector<6x128xf32>
    %628 = arith.mulf %3, %627 : vector<6x128xf32>
    %629 = arith.addf %625, %628 : vector<6x128xf32>
    %c19_303 = arith.constant 19 : index
    %c4_304 = arith.constant 4 : index
    %630 = memref.load %arg2[%c19_303, %c4_304] : memref<20x5xf32, #tpu.memory_space<smem>>
    %631 = vector.broadcast %630 : f32 to vector<6x128xf32>
    %632 = arith.mulf %4, %631 : vector<6x128xf32>
    %633 = arith.addf %629, %632 : vector<6x128xf32>
    %c19_305 = arith.constant 19 : index
    %634 = memref.load %arg3[%c19_305] : memref<20xf32, #tpu.memory_space<smem>>
    %635 = vector.broadcast %634 : f32 to vector<6x128xf32>
    %636 = arith.addf %633, %635 : vector<6x128xf32>
    %cst_306 = arith.constant 0.000000e+00 : f32
    %637 = vector.broadcast %cst_306 : f32 to vector<6x128xf32>
    %638 = arith.maximumf %636, %637 : vector<6x128xf32>
    %c0_307 = arith.constant 0 : index
    %c19_308 = arith.constant 19 : index
    %639 = memref.load %arg4[%c0_307, %c19_308] : memref<2x20xf32, #tpu.memory_space<smem>>
    %640 = vector.broadcast %639 : f32 to vector<6x128xf32>
    %641 = arith.mulf %638, %640 : vector<6x128xf32>
    %642 = arith.addf %610, %641 : vector<6x128xf32>
    %c1_309 = arith.constant 1 : index
    %c19_310 = arith.constant 19 : index
    %643 = memref.load %arg4[%c1_309, %c19_310] : memref<2x20xf32, #tpu.memory_space<smem>>
    %644 = vector.broadcast %643 : f32 to vector<6x128xf32>
    %645 = arith.mulf %638, %644 : vector<6x128xf32>
    %646 = arith.addf %614, %645 : vector<6x128xf32>
    %cst_311 = arith.constant dense<0.000000e+00> : vector<128xf32>
    %647 = vector.multi_reduction <add>, %642, %cst_311 [0] : vector<6x128xf32> to vector<128xf32>
    %648 = vector.shape_cast %647 : vector<128xf32> to vector<1x128xf32>
    %cst_312 = arith.constant 0.166666672 : f32
    %649 = vector.broadcast %cst_312 : f32 to vector<1x128xf32>
    %650 = arith.mulf %648, %649 : vector<1x128xf32>
    %c0_313 = arith.constant 0 : index
    %651 = memref.load %arg5[%c0_313] : memref<2xf32, #tpu.memory_space<smem>>
    %652 = vector.broadcast %651 : f32 to vector<1x128xf32>
    %653 = arith.addf %650, %652 : vector<1x128xf32>
    %cst_314 = arith.constant dense<0.000000e+00> : vector<128xf32>
    %654 = vector.multi_reduction <add>, %646, %cst_314 [0] : vector<6x128xf32> to vector<128xf32>
    %655 = vector.shape_cast %654 : vector<128xf32> to vector<1x128xf32>
    %cst_315 = arith.constant 0.166666672 : f32
    %656 = vector.broadcast %cst_315 : f32 to vector<1x128xf32>
    %657 = arith.mulf %655, %656 : vector<1x128xf32>
    %c1_316 = arith.constant 1 : index
    %658 = memref.load %arg5[%c1_316] : memref<2xf32, #tpu.memory_space<smem>>
    %659 = vector.broadcast %658 : f32 to vector<1x128xf32>
    %660 = arith.addf %657, %659 : vector<1x128xf32>
    %661 = tpu.concatenate %653, %660 in 0 : vector<1x128xf32>, vector<1x128xf32> -> vector<2x128xf32>
    %c0_317 = arith.constant 0 : index
    %c0_318 = arith.constant 0 : index
    %662 = vector.load %arg6[%c0_317, %c0_318] : memref<2x128xf32, #tpu.memory_space<vmem>>, vector<2x128xf32>
    tpu.vector_store %arg6[%c0_317, %c0_318], %661 {strides = array<i32>} : memref<2x128xf32, #tpu.memory_space<vmem>>, vector<2x128xf32>,
    return
  }
  func.func @transform_0(%arg0: i32) -> (i32, i32) {
    %c0_i32 = arith.constant 0 : i32
    %c0_i32_0 = arith.constant 0 : i32
    return %c0_i32, %arg0 : i32, i32
  }
  func.func @transform_1(%arg0: i32) -> (i32, i32) {
    %c0_i32 = arith.constant 0 : i32
    %c0_i32_0 = arith.constant 0 : i32
    %c0_i32_1 = arith.constant 0 : i32
    return %c0_i32, %c0_i32_0 : i32, i32
  }
  func.func @transform_2(%arg0: i32) -> i32 {
    %c0_i32 = arith.constant 0 : i32
    %c0_i32_0 = arith.constant 0 : i32
    return %c0_i32 : i32
  }
  func.func @transform_3(%arg0: i32) -> (i32, i32) {
    %c0_i32 = arith.constant 0 : i32
    %c0_i32_0 = arith.constant 0 : i32
    %c0_i32_1 = arith.constant 0 : i32
    return %c0_i32, %c0_i32_0 : i32, i32
  }
  func.func @transform_4(%arg0: i32) -> i32 {
    %c0_i32 = arith.constant 0 : i32
    %c0_i32_0 = arith.constant 0 : i32
    return %c0_i32 : i32
  }
  func.func @transform_5(%arg0: i32) -> (i32, i32) {
    %c0_i32 = arith.constant 0 : i32
    %c0_i32_0 = arith.constant 0 : i32
    return %c0_i32, %arg0 : i32, i32
  }
}

</mosaic_0001>

<llo_original>
// kernel: tpu_custom_call.1
$region0: #{tpu_custom_call.1}
  #allocation0 [shape = 'u32[]', space=smem, size = 0x4, offset = 0x4, fixed_abs, tag = 'smem constant byte address 0x4 - core index']
  #allocation1 [shape = 'u32[144,128]{1,0:T(1,128)}', space=vmem, size = 0x12000, scoped, tag = 'internal scratch']
  %s0 = inlined_call_operand.vmem [shape: f32[16,128], index: 0, kind: input, shape index: {}]
  %s1 = inlined_call_operand.vmem [shape: f32[20,5], index: 1, kind: input, shape index: {}]
  %s2 = inlined_call_operand.vmem [shape: f32[20], index: 2, kind: input, shape index: {}]
  %s3 = inlined_call_operand.vmem [shape: f32[2,20], index: 3, kind: input, shape index: {}]
  %s4 = inlined_call_operand.vmem [shape: f32[2], index: 4, kind: input, shape index: {}]
  %s5 = inlined_call_operand.hbm [shape: f32[2,128], index: 5, kind: output, shape index: {}]
  %s6 = sld [smem:[#allocation0]]
  $region46: #{tpu_custom_call.1} parent=0
    _
  %s8 = ssub.s32 1, %s6
  %s9 = scalar_select 0, %s8, %s6
  $region1: #{tpu_custom_call.1} parent=0
    #allocation2 [shape = 'u8[12288]{0}', space=smem, size = 0x3000, scoped, tag = 'input window, operand 1, single buffered']
    #allocation3 [shape = 's32[1]{0}', space=sflag, size = 0x4, scoped, tag = 'scoped memory for tpu_custom_call.1']
    #allocation4 [shape = 's32[1]{0}', space=sflag, size = 0x4, scoped, tag = 'scoped memory for tpu_custom_call.1']
    #allocation5 [shape = 'u8[512]{0}', space=smem, size = 0x200, scoped, tag = 'input window, operand 2, single buffered']
    #allocation6 [shape = 's32[1]{0}', space=sflag, size = 0x4, scoped, tag = 'scoped memory for tpu_custom_call.1']
    #allocation7 [shape = 'u8[1024]{0}', space=smem, size = 0x400, scoped, tag = 'input window, operand 3, single buffered']
    #allocation8 [shape = 'u8[512]{0}', space=smem, size = 0x200, scoped, tag = 'input window, operand 4, single buffered']
    #allocation9 [shape = 's32[1]{0}', space=sflag, size = 0x4, scoped, tag = 'scoped memory for tpu_custom_call.1']
    #allocation10 [shape = 'u8[1024]{0}', space=vmem, size = 0x400, scoped, tag = 'output window, operand 0, single buffered']
    %10 = vsyncpa [#allocation4], 0
    %11 = vsyncpa [#allocation6], 0
    %12 = vsyncpa [#allocation9], 0
    %13 = vsyncpa [#allocation3], 0
    // Predicated region
    $region2: #{tpu_custom_call.1} parent=1 // pred_check
      _
    $region3: #{tpu_custom_call.1} parent=1 // pred_check_branch
      %15 = sbr.rel (0) target = $region5
    $region4: #{tpu_custom_call.1} parent=1 // pred_region
      _
    $region5: #{tpu_custom_call.1} parent=1 // pred_fallthru
      _
    // Predicated region
    $region6: #{tpu_custom_call.1} parent=1 // pred_check
      _
    $region7: #{tpu_custom_call.1} parent=1 // pred_check_branch
      %17 = sbr.rel (0) target = $region9
    $region8: #{tpu_custom_call.1} parent=1 // pred_region
      %s19 = ssub.s32 384, 384
      %20 = vsyncadd [#allocation4], %s19
      %s21 = sshll.u32 %s1, 4
      %s22 = int_to_ptr.vmem [resolvable:$true] %s21
      %27 = dma.vmem_to_smem %s22, 384, [#allocation2], [#allocation4], 128, 128, 8
    $region9: #{tpu_custom_call.1} parent=1 // pred_fallthru
      _
    // Predicated region
    $region10: #{tpu_custom_call.1} parent=1 // pred_check
      _
    $region11: #{tpu_custom_call.1} parent=1 // pred_check_branch
      %29 = sbr.rel (0) target = $region13
    $region12: #{tpu_custom_call.1} parent=1 // pred_region
      %s31 = ssub.s32 16, 16
      %32 = vsyncadd [#allocation6], %s31
      %s34 = sshll.u32 %s2, 4
      %s35 = int_to_ptr.vmem [resolvable:$true] %s34
      %37 = dma.vmem_to_smem %s35, 16, [#allocation5], [#allocation6]
    $region13: #{tpu_custom_call.1} parent=1 // pred_fallthru
      _
    // Predicated region
    $region14: #{tpu_custom_call.1} parent=1 // pred_check
      _
    $region15: #{tpu_custom_call.1} parent=1 // pred_check_branch
      %39 = sbr.rel (0) target = $region17
    $region16: #{tpu_custom_call.1} parent=1 // pred_region
      %s41 = ssub.s32 32, 32
      %42 = vsyncadd [#allocation6], %s41
      %s44 = sshll.u32 %s3, 4
      %s45 = int_to_ptr.vmem [resolvable:$true] %s44
      %47 = dma.vmem_to_smem %s45, 32, [#allocation7], [#allocation6]
    $region17: #{tpu_custom_call.1} parent=1 // pred_fallthru
      _
    // Predicated region
    $region18: #{tpu_custom_call.1} parent=1 // pred_check
      _
    $region19: #{tpu_custom_call.1} parent=1 // pred_check_branch
      %49 = sbr.rel (0) target = $region21
    $region20: #{tpu_custom_call.1} parent=1 // pred_region
      %s51 = ssub.s32 16, 16
      %52 = vsyncadd [#allocation9], %s51
      %s54 = sshll.u32 %s4, 4
      %s55 = int_to_ptr.vmem [resolvable:$true] %s54
      %57 = dma.vmem_to_smem %s55, 16, [#allocation8], [#allocation9]
    $region21: #{tpu_custom_call.1} parent=1 // pred_fallthru
      _
    // Predicated region
    $region22: #{tpu_custom_call.1} parent=1 // pred_check
      _
    $region23: #{tpu_custom_call.1} parent=1 // pred_check_branch
      %59 = sbr.rel (0) target = $region25
    $region24: #{tpu_custom_call.1} parent=1 // pred_region
      %60 = dma.done [#allocation4], 384
    $region25: #{tpu_custom_call.1} parent=1 // pred_fallthru
      _
    // Predicated region
    $region26: #{tpu_custom_call.1} parent=1 // pred_check
      _
    $region27: #{tpu_custom_call.1} parent=1 // pred_check_branch
      %62 = sbr.rel (0) target = $region29
    $region28: #{tpu_custom_call.1} parent=1 // pred_region
      %63 = dma.done [#allocation6], 16
    $region29: #{tpu_custom_call.1} parent=1 // pred_fallthru
      _
    // Predicated region
    $region30: #{tpu_custom_call.1} parent=1 // pred_check
      _
    $region31: #{tpu_custom_call.1} parent=1 // pred_check_branch
      %65 = sbr.rel (0) target = $region33
    $region32: #{tpu_custom_call.1} parent=1 // pred_region
      %66 = dma.done [#allocation6], 32
    $region33: #{tpu_custom_call.1} parent=1 // pred_fallthru
      _
    // Predicated region
    $region34: #{tpu_custom_call.1} parent=1 // pred_check
      _
    $region35: #{tpu_custom_call.1} parent=1 // pred_check_branch
      %68 = sbr.rel (0) target = $region37
    $region36: #{tpu_custom_call.1} parent=1 // pred_region
      %69 = dma.done [#allocation9], 16
    $region37: #{tpu_custom_call.1} parent=1 // pred_fallthru
      _
    %70 = sfence
    %v71 = vld [vmem:[%s0] ss:$2 sm:$0x3f]
    %s72 = scalar_lea.vmem %s0, 1
    %v73 = vld [vmem:[%s72] ss:$2 sm:$0x3f]
    %s74 = scalar_lea.vmem %s0, 2
    %v75 = vld [vmem:[%s74] ss:$2 sm:$0x3f]
    %s76 = scalar_lea.vmem %s0, 3
    %v77 = vld [vmem:[%s76] ss:$2 sm:$0x3f]
    %s78 = scalar_lea.vmem %s0, 4
    %v79 = vld [vmem:[%s78] ss:$2 sm:$0x3f]
    %s80 = sld [smem:[#allocation2]]
    %v81 = vstv %s80
    %v82 = vmul.f32 %v71, %v81
    %s83 = sld [smem:[#allocation2 + $0x1]]
    %v84 = vstv %s83
    %v85 = vmul.f32 %v73, %v84
    %v86 = vadd.f32 %v82, %v85
    %s87 = sld [smem:[#allocation2 + $0x2]]
    %v88 = vstv %s87
    %v89 = vmul.f32 %v75, %v88
    %v90 = vadd.f32 %v86, %v89
    %s91 = sld [smem:[#allocation2 + $0x3]]
    %v92 = vstv %s91
    %v93 = vmul.f32 %v77, %v92
    %v94 = vadd.f32 %v90, %v93
    %s95 = sld [smem:[#allocation2 + $0x4]]
    %v96 = vstv %s95
    %v97 = vmul.f32 %v79, %v96
    %v98 = vadd.f32 %v94, %v97
    %s99 = sld [smem:[#allocation5]]
    %v100 = vstv %s99
    %v101 = vadd.f32 %v98, %v100
    %v102 = vmax.f32 %v101, 0.0
    %s103 = sld [smem:[#allocation7]]
    %v104 = vstv %s103
    %v105 = vmul.f32 %v102, %v104
    %v106 = vadd.f32 %v105, 0.0
    %s107 = sld [smem:[#allocation7 + $0x80]]
    %v108 = vstv %s107
    %v109 = vmul.f32 %v102, %v108
    %v110 = vadd.f32 %v109, 0.0
    %s111 = sld [smem:[#allocation2 + $0x80]]
    %v112 = vstv %s111
    %v113 = vmul.f32 %v71, %v112
    %s114 = sld [smem:[#allocation2 + $0x81]]
    %v115 = vstv %s114
    %v116 = vmul.f32 %v73, %v115
    %v117 = vadd.f32 %v113, %v116
    %s118 = sld [smem:[#allocation2 + $0x82]]
    %v119 = vstv %s118
    %v120 = vmul.f32 %v75, %v119
    %v121 = vadd.f32 %v117, %v120
    %s122 = sld [smem:[#allocation2 + $0x83]]
    %v123 = vstv %s122
    %v124 = vmul.f32 %v77, %v123
    %v125 = vadd.f32 %v121, %v124
    %s126 = sld [smem:[#allocation2 + $0x84]]
    %v127 = vstv %s126
    %v128 = vmul.f32 %v79, %v127
    %v129 = vadd.f32 %v125, %v128
    %s130 = sld [smem:[#allocation5 + $0x1]]
    %v131 = vstv %s130
    %v132 = vadd.f32 %v129, %v131
    %v133 = vmax.f32 %v132, 0.0
    %s134 = sld [smem:[#allocation7 + $0x1]]
    %v135 = vstv %s134
    %v136 = vmul.f32 %v133, %v135
    %v137 = vadd.f32 %v106, %v136
    %s138 = sld [smem:[#allocation7 + $0x81]]
    %v139 = vstv %s138
    %v140 = vmul.f32 %v133, %v139
    %v141 = vadd.f32 %v110, %v140
    %s142 = sld [smem:[#allocation2 + $0x100]]
    %v143 = vstv %s142
    %v144 = vmul.f32 %v71, %v143
    %s145 = sld [smem:[#allocation2 + $0x101]]
    %v146 = vstv %s145
    %v147 = vmul.f32 %v73, %v146
    %v148 = vadd.f32 %v144, %v147
    %s149 = sld [smem:[#allocation2 + $0x102]]
    %v150 = vstv %s149
    %v151 = vmul.f32 %v75, %v150
    %v152 = vadd.f32 %v148, %v151
    %s153 = sld [smem:[#allocation2 + $0x103]]
    %v154 = vstv %s153
    %v155 = vmul.f32 %v77, %v154
    %v156 = vadd.f32 %v152, %v155
    %s157 = sld [smem:[#allocation2 + $0x104]]
    %v158 = vstv %s157
    %v159 = vmul.f32 %v79, %v158
    %v160 = vadd.f32 %v156, %v159
    %s161 = sld [smem:[#allocation5 + $0x2]]
    %v162 = vstv %s161
    %v163 = vadd.f32 %v160, %v162
    %v164 = vmax.f32 %v163, 0.0
    %s165 = sld [smem:[#allocation7 + $0x2]]
    %v166 = vstv %s165
    %v167 = vmul.f32 %v164, %v166
    %v168 = vadd.f32 %v137, %v167
    %s169 = sld [smem:[#allocation7 + $0x82]]
    %v170 = vstv %s169
    %v171 = vmul.f32 %v164, %v170
    %v172 = vadd.f32 %v141, %v171
    %s173 = sld [smem:[#allocation2 + $0x180]]
    %v174 = vstv %s173
    %v175 = vmul.f32 %v71, %v174
    %s176 = sld [smem:[#allocation2 + $0x181]]
    %v177 = vstv %s176
    %v178 = vmul.f32 %v73, %v177
    %v179 = vadd.f32 %v175, %v178
    %s180 = sld [smem:[#allocation2 + $0x182]]
    %v181 = vstv %s180
    %v182 = vmul.f32 %v75, %v181
    %v183 = vadd.f32 %v179, %v182
    %s184 = sld [smem:[#allocation2 + $0x183]]
    %v185 = vstv %s184
    %v186 = vmul.f32 %v77, %v185
    %v187 = vadd.f32 %v183, %v186
    %s188 = sld [smem:[#allocation2 + $0x184]]
    %v189 = vstv %s188
    %v190 = vmul.f32 %v79, %v189
    %v191 = vadd.f32 %v187, %v190
    %s192 = sld [smem:[#allocation5 + $0x3]]
    %v193 = vstv %s192
    %v194 = vadd.f32 %v191, %v193
    %v195 = vmax.f32 %v194, 0.0
    %s196 = sld [smem:[#allocation7 + $0x3]]
    %v197 = vstv %s196
    %v198 = vmul.f32 %v195, %v197
    %v199 = vadd.f32 %v168, %v198
    %s200 = sld [smem:[#allocation7 + $0x83]]
    %v201 = vstv %s200
    %v202 = vmul.f32 %v195, %v201
    %v203 = vadd.f32 %v172, %v202
    %s204 = sld [smem:[#allocation2 + $0x200]]
    %v205 = vstv %s204
    %v206 = vmul.f32 %v71, %v205
    %s207 = sld [smem:[#allocation2 + $0x201]]
    %v208 = vstv %s207
    %v209 = vmul.f32 %v73, %v208
    %v210 = vadd.f32 %v206, %v209
    %s211 = sld [smem:[#allocation2 + $0x202]]
    %v212 = vstv %s211
    %v213 = vmul.f32 %v75, %v212
    %v214 = vadd.f32 %v210, %v213
    %s215 = sld [smem:[#allocation2 + $0x203]]
    %v216 = vstv %s215
    %v217 = vmul.f32 %v77, %v216
    %v218 = vadd.f32 %v214, %v217
    %s219 = sld [smem:[#allocation2 + $0x204]]
    %v220 = vstv %s219
    %v221 = vmul.f32 %v79, %v220
    %v222 = vadd.f32 %v218, %v221
    %s223 = sld [smem:[#allocation5 + $0x4]]
    %v224 = vstv %s223
    %v225 = vadd.f32 %v222, %v224
    %v226 = vmax.f32 %v225, 0.0
    %s227 = sld [smem:[#allocation7 + $0x4]]
    %v228 = vstv %s227
    %v229 = vmul.f32 %v226, %v228
    %v230 = vadd.f32 %v199, %v229
    %s231 = sld [smem:[#allocation7 + $0x84]]
    %v232 = vstv %s231
    %v233 = vmul.f32 %v226, %v232
    %v234 = vadd.f32 %v203, %v233
    %s235 = sld [smem:[#allocation2 + $0x280]]
    %v236 = vstv %s235
    %v237 = vmul.f32 %v71, %v236
    %s238 = sld [smem:[#allocation2 + $0x281]]
    %v239 = vstv %s238
    %v240 = vmul.f32 %v73, %v239
    %v241 = vadd.f32 %v237, %v240
    %s242 = sld [smem:[#allocation2 + $0x282]]
    %v243 = vstv %s242
    %v244 = vmul.f32 %v75, %v243
    %v245 = vadd.f32 %v241, %v244
    %s246 = sld [smem:[#allocation2 + $0x283]]
    %v247 = vstv %s246
    %v248 = vmul.f32 %v77, %v247
    %v249 = vadd.f32 %v245, %v248
    %s250 = sld [smem:[#allocation2 + $0x284]]
    %v251 = vstv %s250
    %v252 = vmul.f32 %v79, %v251
    %v253 = vadd.f32 %v249, %v252
    %s254 = sld [smem:[#allocation5 + $0x5]]
    %v255 = vstv %s254
    %v256 = vadd.f32 %v253, %v255
    %v257 = vmax.f32 %v256, 0.0
    %s258 = sld [smem:[#allocation7 + $0x5]]
    %v259 = vstv %s258
    %v260 = vmul.f32 %v257, %v259
    %v261 = vadd.f32 %v230, %v260
    %s262 = sld [smem:[#allocation7 + $0x85]]
    %v263 = vstv %s262
    %v264 = vmul.f32 %v257, %v263
    %v265 = vadd.f32 %v234, %v264
    %s266 = sld [smem:[#allocation2 + $0x300]]
    %v267 = vstv %s266
    %v268 = vmul.f32 %v71, %v267
    %s269 = sld [smem:[#allocation2 + $0x301]]
    %v270 = vstv %s269
    %v271 = vmul.f32 %v73, %v270
    %v272 = vadd.f32 %v268, %v271
    %s273 = sld [smem:[#allocation2 + $0x302]]
    %v274 = vstv %s273
    %v275 = vmul.f32 %v75, %v274
    %v276 = vadd.f32 %v272, %v275
    %s277 = sld [smem:[#allocation2 + $0x303]]
    %v278 = vstv %s277
    %v279 = vmul.f32 %v77, %v278
    %v280 = vadd.f32 %v276, %v279
    %s281 = sld [smem:[#allocation2 + $0x304]]
    %v282 = vstv %s281
    %v283 = vmul.f32 %v79, %v282
    %v284 = vadd.f32 %v280, %v283
    %s285 = sld [smem:[#allocation5 + $0x6]]
    %v286 = vstv %s285
    %v287 = vadd.f32 %v284, %v286
    %v288 = vmax.f32 %v287, 0.0
    %s289 = sld [smem:[#allocation7 + $0x6]]
    %v290 = vstv %s289
    %v291 = vmul.f32 %v288, %v290
    %v292 = vadd.f32 %v261, %v291
    %s293 = sld [smem:[#allocation7 + $0x86]]
    %v294 = vstv %s293
    %v295 = vmul.f32 %v288, %v294
    %v296 = vadd.f32 %v265, %v295
    %s297 = sld [smem:[#allocation2 + $0x380]]
    %v298 = vstv %s297
    %v299 = vmul.f32 %v71, %v298
    %s300 = sld [smem:[#allocation2 + $0x381]]
    %v301 = vstv %s300
    %v302 = vmul.f32 %v73, %v301
    %v303 = vadd.f32 %v299, %v302
    %s304 = sld [smem:[#allocation2 + $0x382]]
    %v305 = vstv %s304
    %v306 = vmul.f32 %v75, %v305
    %v307 = vadd.f32 %v303, %v306
    %s308 = sld [smem:[#allocation2 + $0x383]]
    %v309 = vstv %s308
    %v310 = vmul.f32 %v77, %v309
    %v311 = vadd.f32 %v307, %v310
    %s312 = sld [smem:[#allocation2 + $0x384]]
    %v313 = vstv %s312
    %v314 = vmul.f32 %v79, %v313
    %v315 = vadd.f32 %v311, %v314
    %s316 = sld [smem:[#allocation5 + $0x7]]
    %v317 = vstv %s316
    %v318 = vadd.f32 %v315, %v317
    %v319 = vmax.f32 %v318, 0.0
    %s320 = sld [smem:[#allocation7 + $0x7]]
    %v321 = vstv %s320
    %v322 = vmul.f32 %v319, %v321
    %v323 = vadd.f32 %v292, %v322
    %s324 = sld [smem:[#allocation7 + $0x87]]
    %v325 = vstv %s324
    %v326 = vmul.f32 %v319, %v325
    %v327 = vadd.f32 %v296, %v326
    %s328 = sld [smem:[#allocation2 + $0x400]]
    %v329 = vstv %s328
    %v330 = vmul.f32 %v71, %v329
    %s331 = sld [smem:[#allocation2 + $0x401]]
    %v332 = vstv %s331
    %v333 = vmul.f32 %v73, %v332
    %v334 = vadd.f32 %v330, %v333
    %s335 = sld [smem:[#allocation2 + $0x402]]
    %v336 = vstv %s335
    %v337 = vmul.f32 %v75, %v336
    %v338 = vadd.f32 %v334, %v337
    %s339 = sld [smem:[#allocation2 + $0x403]]
    %v340 = vstv %s339
    %v341 = vmul.f32 %v77, %v340
    %v342 = vadd.f32 %v338, %v341
    %s343 = sld [smem:[#allocation2 + $0x404]]
    %v344 = vstv %s343
    %v345 = vmul.f32 %v79, %v344
    %v346 = vadd.f32 %v342, %v345
    %s347 = sld [smem:[#allocation5 + $0x8]]
    %v348 = vstv %s347
    %v349 = vadd.f32 %v346, %v348
    %v350 = vmax.f32 %v349, 0.0
    %s351 = sld [smem:[#allocation7 + $0x8]]
    %v352 = vstv %s351
    %v353 = vmul.f32 %v350, %v352
    %v354 = vadd.f32 %v323, %v353
    %s355 = sld [smem:[#allocation7 + $0x88]]
    %v356 = vstv %s355
    %v357 = vmul.f32 %v350, %v356
    %v358 = vadd.f32 %v327, %v357
    %s359 = sld [smem:[#allocation2 + $0x480]]
    %v360 = vstv %s359
    %v361 = vmul.f32 %v71, %v360
    %s362 = sld [smem:[#allocation2 + $0x481]]
    %v363 = vstv %s362
    %v364 = vmul.f32 %v73, %v363
    %v365 = vadd.f32 %v361, %v364
    %s366 = sld [smem:[#allocation2 + $0x482]]
    %v367 = vstv %s366
    %v368 = vmul.f32 %v75, %v367
    %v369 = vadd.f32 %v365, %v368
    %s370 = sld [smem:[#allocation2 + $0x483]]
    %v371 = vstv %s370
    %v372 = vmul.f32 %v77, %v371
    %v373 = vadd.f32 %v369, %v372
    %s374 = sld [smem:[#allocation2 + $0x484]]
    %v375 = vstv %s374
    %v376 = vmul.f32 %v79, %v375
    %v377 = vadd.f32 %v373, %v376
    %s378 = sld [smem:[#allocation5 + $0x9]]
    %v379 = vstv %s378
    %v380 = vadd.f32 %v377, %v379
    %v381 = vmax.f32 %v380, 0.0
    %s382 = sld [smem:[#allocation7 + $0x9]]
    %v383 = vstv %s382
    %v384 = vmul.f32 %v381, %v383
    %v385 = vadd.f32 %v354, %v384
    %s386 = sld [smem:[#allocation7 + $0x89]]
    %v387 = vstv %s386
    %v388 = vmul.f32 %v381, %v387
    %v389 = vadd.f32 %v358, %v388
    %s390 = sld [smem:[#allocation2 + $0x500]]
    %v391 = vstv %s390
    %v392 = vmul.f32 %v71, %v391
    %s393 = sld [smem:[#allocation2 + $0x501]]
    %v394 = vstv %s393
    %v395 = vmul.f32 %v73, %v394
    %v396 = vadd.f32 %v392, %v395
    %s397 = sld [smem:[#allocation2 + $0x502]]
    %v398 = vstv %s397
    %v399 = vmul.f32 %v75, %v398
    %v400 = vadd.f32 %v396, %v399
    %s401 = sld [smem:[#allocation2 + $0x503]]
    %v402 = vstv %s401
    %v403 = vmul.f32 %v77, %v402
    %v404 = vadd.f32 %v400, %v403
    %s405 = sld [smem:[#allocation2 + $0x504]]
    %v406 = vstv %s405
    %v407 = vmul.f32 %v79, %v406
    %v408 = vadd.f32 %v404, %v407
    %s409 = sld [smem:[#allocation5 + $0xa]]
    %v410 = vstv %s409
    %v411 = vadd.f32 %v408, %v410
    %v412 = vmax.f32 %v411, 0.0
    %s413 = sld [smem:[#allocation7 + $0xa]]
    %v414 = vstv %s413
    %v415 = vmul.f32 %v412, %v414
    %v416 = vadd.f32 %v385, %v415
    %s417 = sld [smem:[#allocation7 + $0x8a]]
    %v418 = vstv %s417
    %v419 = vmul.f32 %v412, %v418
    %v420 = vadd.f32 %v389, %v419
    %s421 = sld [smem:[#allocation2 + $0x580]]
    %v422 = vstv %s421
    %v423 = vmul.f32 %v71, %v422
    %s424 = sld [smem:[#allocation2 + $0x581]]
    %v425 = vstv %s424
    %v426 = vmul.f32 %v73, %v425
    %v427 = vadd.f32 %v423, %v426
    %s428 = sld [smem:[#allocation2 + $0x582]]
    %v429 = vstv %s428
    %v430 = vmul.f32 %v75, %v429
    %v431 = vadd.f32 %v427, %v430
    %s432 = sld [smem:[#allocation2 + $0x583]]
    %v433 = vstv %s432
    %v434 = vmul.f32 %v77, %v433
    %v435 = vadd.f32 %v431, %v434
    %s436 = sld [smem:[#allocation2 + $0x584]]
    %v437 = vstv %s436
    %v438 = vmul.f32 %v79, %v437
    %v439 = vadd.f32 %v435, %v438
    %s440 = sld [smem:[#allocation5 + $0xb]]
    %v441 = vstv %s440
    %v442 = vadd.f32 %v439, %v441
    %v443 = vmax.f32 %v442, 0.0
    %s444 = sld [smem:[#allocation7 + $0xb]]
    %v445 = vstv %s444
    %v446 = vmul.f32 %v443, %v445
    %v447 = vadd.f32 %v416, %v446
    %s448 = sld [smem:[#allocation7 + $0x8b]]
    %v449 = vstv %s448
    %v450 = vmul.f32 %v443, %v449
    %v451 = vadd.f32 %v420, %v450
    %s452 = sld [smem:[#allocation2 + $0x600]]
    %v453 = vstv %s452
    %v454 = vmul.f32 %v71, %v453
    %s455 = sld [smem:[#allocation2 + $0x601]]
    %v456 = vstv %s455
    %v457 = vmul.f32 %v73, %v456
    %v458 = vadd.f32 %v454, %v457
    %s459 = sld [smem:[#allocation2 + $0x602]]
    %v460 = vstv %s459
    %v461 = vmul.f32 %v75, %v460
    %v462 = vadd.f32 %v458, %v461
    %s463 = sld [smem:[#allocation2 + $0x603]]
    %v464 = vstv %s463
    %v465 = vmul.f32 %v77, %v464
    %v466 = vadd.f32 %v462, %v465
    %s467 = sld [smem:[#allocation2 + $0x604]]
    %v468 = vstv %s467
    %v469 = vmul.f32 %v79, %v468
    %v470 = vadd.f32 %v466, %v469
    %s471 = sld [smem:[#allocation5 + $0xc]]
    %v472 = vstv %s471
    %v473 = vadd.f32 %v470, %v472
    %v474 = vmax.f32 %v473, 0.0
    %s475 = sld [smem:[#allocation7 + $0xc]]
    %v476 = vstv %s475
    %v477 = vmul.f32 %v474, %v476
    %v478 = vadd.f32 %v447, %v477
    %s479 = sld [smem:[#allocation7 + $0x8c]]
    %v480 = vstv %s479
    %v481 = vmul.f32 %v474, %v480
    %v482 = vadd.f32 %v451, %v481
    %s483 = sld [smem:[#allocation2 + $0x680]]
    %v484 = vstv %s483
    %v485 = vmul.f32 %v71, %v484
    %s486 = sld [smem:[#allocation2 + $0x681]]
    %v487 = vstv %s486
    %v488 = vmul.f32 %v73, %v487
    %v489 = vadd.f32 %v485, %v488
    %s490 = sld [smem:[#allocation2 + $0x682]]
    %v491 = vstv %s490
    %v492 = vmul.f32 %v75, %v491
    %v493 = vadd.f32 %v489, %v492
    %s494 = sld [smem:[#allocation2 + $0x683]]
    %v495 = vstv %s494
    %v496 = vmul.f32 %v77, %v495
    %v497 = vadd.f32 %v493, %v496
    %s498 = sld [smem:[#allocation2 + $0x684]]
    %v499 = vstv %s498
    %v500 = vmul.f32 %v79, %v499
    %v501 = vadd.f32 %v497, %v500
    %s502 = sld [smem:[#allocation5 + $0xd]]
    %v503 = vstv %s502
    %v504 = vadd.f32 %v501, %v503
    %v505 = vmax.f32 %v504, 0.0
    %s506 = sld [smem:[#allocation7 + $0xd]]
    %v507 = vstv %s506
    %v508 = vmul.f32 %v505, %v507
    %v509 = vadd.f32 %v478, %v508
    %s510 = sld [smem:[#allocation7 + $0x8d]]
    %v511 = vstv %s510
    %v512 = vmul.f32 %v505, %v511
    %v513 = vadd.f32 %v482, %v512
    %s514 = sld [smem:[#allocation2 + $0x700]]
    %v515 = vstv %s514
    %v516 = vmul.f32 %v71, %v515
    %s517 = sld [smem:[#allocation2 + $0x701]]
    %v518 = vstv %s517
    %v519 = vmul.f32 %v73, %v518
    %v520 = vadd.f32 %v516, %v519
    %s521 = sld [smem:[#allocation2 + $0x702]]
    %v522 = vstv %s521
    %v523 = vmul.f32 %v75, %v522
    %v524 = vadd.f32 %v520, %v523
    %s525 = sld [smem:[#allocation2 + $0x703]]
    %v526 = vstv %s525
    %v527 = vmul.f32 %v77, %v526
    %v528 = vadd.f32 %v524, %v527
    %s529 = sld [smem:[#allocation2 + $0x704]]
    %v530 = vstv %s529
    %v531 = vmul.f32 %v79, %v530
    %v532 = vadd.f32 %v528, %v531
    %s533 = sld [smem:[#allocation5 + $0xe]]
    %v534 = vstv %s533
    %v535 = vadd.f32 %v532, %v534
    %v536 = vmax.f32 %v535, 0.0
    %s537 = sld [smem:[#allocation7 + $0xe]]
    %v538 = vstv %s537
    %v539 = vmul.f32 %v536, %v538
    %v540 = vadd.f32 %v509, %v539
    %s541 = sld [smem:[#allocation7 + $0x8e]]
    %v542 = vstv %s541
    %v543 = vmul.f32 %v536, %v542
    %v544 = vadd.f32 %v513, %v543
    %s545 = sld [smem:[#allocation2 + $0x780]]
    %v546 = vstv %s545
    %v547 = vmul.f32 %v71, %v546
    %s548 = sld [smem:[#allocation2 + $0x781]]
    %v549 = vstv %s548
    %v550 = vmul.f32 %v73, %v549
    %v551 = vadd.f32 %v547, %v550
    %s552 = sld [smem:[#allocation2 + $0x782]]
    %v553 = vstv %s552
    %v554 = vmul.f32 %v75, %v553
    %v555 = vadd.f32 %v551, %v554
    %s556 = sld [smem:[#allocation2 + $0x783]]
    %v557 = vstv %s556
    %v558 = vmul.f32 %v77, %v557
    %v559 = vadd.f32 %v555, %v558
    %s560 = sld [smem:[#allocation2 + $0x784]]
    %v561 = vstv %s560
    %v562 = vmul.f32 %v79, %v561
    %v563 = vadd.f32 %v559, %v562
    %s564 = sld [smem:[#allocation5 + $0xf]]
    %v565 = vstv %s564
    %v566 = vadd.f32 %v563, %v565
    %v567 = vmax.f32 %v566, 0.0
    %s568 = sld [smem:[#allocation7 + $0xf]]
    %v569 = vstv %s568
    %v570 = vmul.f32 %v567, %v569
    %v571 = vadd.f32 %v540, %v570
    %s572 = sld [smem:[#allocation7 + $0x8f]]
    %v573 = vstv %s572
    %v574 = vmul.f32 %v567, %v573
    %v575 = vadd.f32 %v544, %v574
    %s576 = sld [smem:[#allocation2 + $0x800]]
    %v577 = vstv %s576
    %v578 = vmul.f32 %v71, %v577
    %s579 = sld [smem:[#allocation2 + $0x801]]
    %v580 = vstv %s579
    %v581 = vmul.f32 %v73, %v580
    %v582 = vadd.f32 %v578, %v581
    %s583 = sld [smem:[#allocation2 + $0x802]]
    %v584 = vstv %s583
    %v585 = vmul.f32 %v75, %v584
    %v586 = vadd.f32 %v582, %v585
    %s587 = sld [smem:[#allocation2 + $0x803]]
    %v588 = vstv %s587
    %v589 = vmul.f32 %v77, %v588
    %v590 = vadd.f32 %v586, %v589
    %s591 = sld [smem:[#allocation2 + $0x804]]
    %v592 = vstv %s591
    %v593 = vmul.f32 %v79, %v592
    %v594 = vadd.f32 %v590, %v593
    %s595 = sld [smem:[#allocation5 + $0x10]]
    %v596 = vstv %s595
    %v597 = vadd.f32 %v594, %v596
    %v598 = vmax.f32 %v597, 0.0
    %s599 = sld [smem:[#allocation7 + $0x10]]
    %v600 = vstv %s599
    %v601 = vmul.f32 %v598, %v600
    %v602 = vadd.f32 %v571, %v601
    %s603 = sld [smem:[#allocation7 + $0x90]]
    %v604 = vstv %s603
    %v605 = vmul.f32 %v598, %v604
    %v606 = vadd.f32 %v575, %v605
    %s607 = sld [smem:[#allocation2 + $0x880]]
    %v608 = vstv %s607
    %v609 = vmul.f32 %v71, %v608
    %s610 = sld [smem:[#allocation2 + $0x881]]
    %v611 = vstv %s610
    %v612 = vmul.f32 %v73, %v611
    %v613 = vadd.f32 %v609, %v612
    %s614 = sld [smem:[#allocation2 + $0x882]]
    %v615 = vstv %s614
    %v616 = vmul.f32 %v75, %v615
    %v617 = vadd.f32 %v613, %v616
    %s618 = sld [smem:[#allocation2 + $0x883]]
    %v619 = vstv %s618
    %v620 = vmul.f32 %v77, %v619
    %v621 = vadd.f32 %v617, %v620
    %s622 = sld [smem:[#allocation2 + $0x884]]
    %v623 = vstv %s622
    %v624 = vmul.f32 %v79, %v623
    %v625 = vadd.f32 %v621, %v624
    %s626 = sld [smem:[#allocation5 + $0x11]]
    %v627 = vstv %s626
    %v628 = vadd.f32 %v625, %v627
    %v629 = vmax.f32 %v628, 0.0
    %s630 = sld [smem:[#allocation7 + $0x11]]
    %v631 = vstv %s630
    %v632 = vmul.f32 %v629, %v631
    %v633 = vadd.f32 %v602, %v632
    %s634 = sld [smem:[#allocation7 + $0x91]]
    %v635 = vstv %s634
    %v636 = vmul.f32 %v629, %v635
    %v637 = vadd.f32 %v606, %v636
    %s638 = sld [smem:[#allocation2 + $0x900]]
    %v639 = vstv %s638
    %v640 = vmul.f32 %v71, %v639
    %s641 = sld [smem:[#allocation2 + $0x901]]
    %v642 = vstv %s641
    %v643 = vmul.f32 %v73, %v642
    %v644 = vadd.f32 %v640, %v643
    %s645 = sld [smem:[#allocation2 + $0x902]]
    %v646 = vstv %s645
    %v647 = vmul.f32 %v75, %v646
    %v648 = vadd.f32 %v644, %v647
    %s649 = sld [smem:[#allocation2 + $0x903]]
    %v650 = vstv %s649
    %v651 = vmul.f32 %v77, %v650
    %v652 = vadd.f32 %v648, %v651
    %s653 = sld [smem:[#allocation2 + $0x904]]
    %v654 = vstv %s653
    %v655 = vmul.f32 %v79, %v654
    %v656 = vadd.f32 %v652, %v655
    %s657 = sld [smem:[#allocation5 + $0x12]]
    %v658 = vstv %s657
    %v659 = vadd.f32 %v656, %v658
    %v660 = vmax.f32 %v659, 0.0
    %s661 = sld [smem:[#allocation7 + $0x12]]
    %v662 = vstv %s661
    %v663 = vmul.f32 %v660, %v662
    %v664 = vadd.f32 %v633, %v663
    %s665 = sld [smem:[#allocation7 + $0x92]]
    %v666 = vstv %s665
    %v667 = vmul.f32 %v660, %v666
    %v668 = vadd.f32 %v637, %v667
    %s669 = sld [smem:[#allocation2 + $0x980]]
    %v670 = vstv %s669
    %v671 = vmul.f32 %v71, %v670
    %s672 = sld [smem:[#allocation2 + $0x981]]
    %v673 = vstv %s672
    %v674 = vmul.f32 %v73, %v673
    %v675 = vadd.f32 %v671, %v674
    %s676 = sld [smem:[#allocation2 + $0x982]]
    %v677 = vstv %s676
    %v678 = vmul.f32 %v75, %v677
    %v679 = vadd.f32 %v675, %v678
    %s680 = sld [smem:[#allocation2 + $0x983]]
    %v681 = vstv %s680
    %v682 = vmul.f32 %v77, %v681
    %v683 = vadd.f32 %v679, %v682
    %s684 = sld [smem:[#allocation2 + $0x984]]
    %v685 = vstv %s684
    %v686 = vmul.f32 %v79, %v685
    %v687 = vadd.f32 %v683, %v686
    %s688 = sld [smem:[#allocation5 + $0x13]]
    %v689 = vstv %s688
    %v690 = vadd.f32 %v687, %v689
    %v691 = vmax.f32 %v690, 0.0
    %s692 = sld [smem:[#allocation7 + $0x13]]
    %v693 = vstv %s692
    %v694 = vmul.f32 %v691, %v693
    %v695 = vadd.f32 %v664, %v694
    %s696 = sld [smem:[#allocation7 + $0x93]]
    %v697 = vstv %s696
    %v698 = vmul.f32 %v691, %v697
    %v699 = vadd.f32 %v668, %v698
    %vm700 = vcmask 1045504
    %v701 = vsel %vm700, %v695, 0.0
    %v702 = vrot.slane %v701, 4
    %v703 = vadd.f32 %v701, %v702
    %v704 = vrot.slane %v703, 2
    %v705 = vadd.f32 %v703, %v704
    %v706 = vrot.slane %v705, 1
    %v707 = vadd.f32 %v705, %v706
    %v708 = vmul.f32 %v707, 0.16666667
    %s709 = sld [smem:[#allocation8]]
    %v710 = vstv %s709
    %v711 = vadd.f32 %v708, %v710
    %v712 = vsel %vm700, %v699, 0.0
    %v713 = vrot.slane %v712, 4
    %v714 = vadd.f32 %v712, %v713
    %v715 = vrot.slane %v714, 2
    %v716 = vadd.f32 %v714, %v715
    %v717 = vrot.slane %v716, 1
    %v718 = vadd.f32 %v716, %v717
    %v719 = vmul.f32 %v718, 0.16666667
    %s720 = sld [smem:[#allocation8 + $0x1]]
    %v721 = vstv %s720
    %v722 = vadd.f32 %v719, %v721
    %vm723 = vcmask 1040384
    %v724 = vsel %vm723, %v711, %v722
    %725 = vst [vmem:[#allocation10] sm:$0x3] %v724
    // Predicated region
    $region38: #{tpu_custom_call.1} parent=1 // pred_check
      _
    $region39: #{tpu_custom_call.1} parent=1 // pred_check_branch
      %727 = sbr.rel (0) target = $region41
    $region40: #{tpu_custom_call.1} parent=1 // pred_region
      %s729 = ssub.s32 32, 32
      %730 = vsyncadd [#allocation3], %s729
      %s732 = sshll.u32 [#allocation10], 4
      %s733 = int_to_ptr.vmem [resolvable:$true] %s732
      %735 = dma.vmem_to_hbm [thread:$0]  %s733, 32, %s5, [#allocation3]
    $region41: #{tpu_custom_call.1} parent=1 // pred_fallthru
      _
    // Predicated region
    $region42: #{tpu_custom_call.1} parent=1 // pred_check
      _
    $region43: #{tpu_custom_call.1} parent=1 // pred_check_branch
      %737 = sbr.rel (0) target = $region45
    $region44: #{tpu_custom_call.1} parent=1 // pred_region
      %738 = dma.done [#allocation3], 32
    $region45: #{tpu_custom_call.1} parent=1 // pred_fallthru
      _
    %739 = vsyncpa [#allocation3], 1
    %740 = vsyncpa [#allocation4], 1
    %741 = vsyncpa [#allocation6], 1
    %742 = vsyncpa [#allocation9], 1

</llo_original>
